<compile_context>
chip_gen: v7x
topology: tpu7x:2x2x1
jax: 0.10.0
libtpu: 0.0.40
codegen_flags: <defaults>
</compile_context>

<pallas_src>
import jax
import jax.numpy as jnp
from jax import lax
from jax.experimental import pallas as pl
from jax.experimental.pallas import tpu as pltpu

LATENT_D = 32
NUM_NEURONS = 512
NUM_JOINTS = 42
LANE = 128                      # joint axis padded to one full lane group
OUT_COLS = 6 * LANE             # 768: component-major, lane-padded last-linear width


def _leaky_relu(x, slope=0.2):
    return jnp.where(x >= 0, x, slope * x)


# ---------------------------------------------------------------------------
# Fused kernel: decoder MLP + 6D->rotmat->quaternion->axis-angle
#   inputs : z (1,32) f32, w1 (32,512) bf16, w2 (512,512) bf16,
#            w3 (512,768) bf16 (component-major, joints padded to 128 lanes),
#            biases (3,768) f32  [row0=b1(512), row1=b2(512), row2=b3(768)]
#   output : (3,128) f32 axis-angle; rows = (aa_x, aa_y, aa_z), lanes = joints
# ---------------------------------------------------------------------------
def vposer_fused_kernel(z_ref, w1_ref, w2_ref, w3_ref, b_ref, o_ref):
    b1 = b_ref[0:1, 0:NUM_NEURONS]
    b2 = b_ref[1:2, 0:NUM_NEURONS]
    b3 = b_ref[2:3, :]

    # ---- decoder MLP (MXU: bf16 operands, f32 accumulation) ----
    h = jnp.dot(z_ref[...].astype(jnp.bfloat16), w1_ref[...],
                preferred_element_type=jnp.float32) + b1
    h = _leaky_relu(h)
    # nn.Dropout(p=0.1) is the identity in eval() mode.
    h = jnp.dot(h.astype(jnp.bfloat16), w2_ref[...],
                preferred_element_type=jnp.float32) + b2
    h = _leaky_relu(h)
    x = jnp.dot(h.astype(jnp.bfloat16), w3_ref[...],
                preferred_element_type=jnp.float32) + b3          # (1, 768)

    # ---- ContinuousRotReprDecoder: 6D -> rotation matrix ----
    # component-major layout: component c of all joints = x[:, c*128:(c+1)*128].
    # Per-joint (3,2) row-major view: col0 (a1) = comps 0,2,4; col1 (a2) = 1,3,5.
    a1x, a2x = x[:, 0 * LANE:1 * LANE], x[:, 1 * LANE:2 * LANE]
    a1y, a2y = x[:, 2 * LANE:3 * LANE], x[:, 3 * LANE:4 * LANE]
    a1z, a2z = x[:, 4 * LANE:5 * LANE], x[:, 5 * LANE:6 * LANE]

    eps_n = 1e-12   # F.normalize eps; rsqrt(max(n^2, eps^2)) == 1/max(n, eps)
    inv_n1 = lax.rsqrt(jnp.maximum(a1x * a1x + a1y * a1y + a1z * a1z, eps_n * eps_n))
    b1x, b1y, b1z = a1x * inv_n1, a1y * inv_n1, a1z * inv_n1
    dot = b1x * a2x + b1y * a2y + b1z * a2z
    u2x, u2y, u2z = a2x - dot * b1x, a2y - dot * b1y, a2z - dot * b1z
    inv_n2 = lax.rsqrt(jnp.maximum(u2x * u2x + u2y * u2y + u2z * u2z, eps_n * eps_n))
    b2x, b2y, b2z = u2x * inv_n2, u2y * inv_n2, u2z * inv_n2
    b3x = b1y * b2z - b1z * b2y
    b3y = b1z * b2x - b1x * b2z
    b3z = b1x * b2y - b1y * b2x

    # R has columns [b1 b2 b3]; torchgeometry's rotation_matrix_to_quaternion
    # works on rmat_t = R^T, i.e. m[i][j] = R[j][i]  ->  rows of m are b1,b2,b3.
    m00, m01, m02 = b1x, b1y, b1z
    m10, m11, m12 = b2x, b2y, b2z
    m20, m21, m22 = b3x, b3y, b3z

    eps_q = 1e-6
    c_d2 = m22 < eps_q
    c_d0d1 = m00 > m11
    c_d0nd1 = m00 < -m11

    t0 = 1.0 + m00 - m11 - m22
    t1 = 1.0 - m00 + m11 - m22
    t2 = 1.0 - m00 - m11 + m22
    t3 = 1.0 + m00 + m11 + m22

    c0 = jnp.logical_and(c_d2, c_d0d1).astype(jnp.float32)
    c1 = jnp.logical_and(c_d2, jnp.logical_not(c_d0d1)).astype(jnp.float32)
    c2 = jnp.logical_and(jnp.logical_not(c_d2), c_d0nd1).astype(jnp.float32)
    c3 = jnp.logical_and(jnp.logical_not(c_d2), jnp.logical_not(c_d0nd1)).astype(jnp.float32)

    # Candidate quaternions (w, x, y, z), exactly as in torchgeometry.
    q0w, q0x, q0y, q0z = m12 - m21, t0, m01 + m10, m20 + m02
    q1w, q1x, q1y, q1z = m20 - m02, m01 + m10, t1, m12 + m21
    q2w, q2x, q2y, q2z = m01 - m10, m20 + m02, m12 + m21, t2
    q3w, q3x, q3y, q3z = t3, m12 - m21, m20 - m02, m01 - m10

    t_sel = t0 * c0 + t1 * c1 + t2 * c2 + t3 * c3
    half_inv_denom = 0.5 * lax.rsqrt(t_sel)
    qw = (q0w * c0 + q1w * c1 + q2w * c2 + q3w * c3) * half_inv_denom
    qx = (q0x * c0 + q1x * c1 + q2x * c2 + q3x * c3) * half_inv_denom
    qy = (q0y * c0 + q1y * c1 + q2y * c2 + q3y * c3) * half_inv_denom
    qz = (q0z * c0 + q1z * c1 + q2z * c2 + q3z * c3) * half_inv_denom

    # quaternion -> axis-angle (torchgeometry.quaternion_to_angle_axis)
    sin_sq = qx * qx + qy * qy + qz * qz
    sin_theta = jnp.sqrt(sin_sq)
    two_theta = 2.0 * jnp.where(qw < 0.0,
                                jnp.arctan2(-sin_theta, -qw),
                                jnp.arctan2(sin_theta, qw))
    k = jnp.where(sin_sq > 0.0, two_theta / jnp.maximum(sin_theta, 1e-30), 2.0)

    # Lane-dense (128-wide, unmasked) stores.
    o_ref[0:1, :] = qx * k
    o_ref[1:2, :] = qy * k
    o_ref[2:3, :] = qz * k


# ---------------------------------------------------------------------------
# Wrappers
# ---------------------------------------------------------------------------
def vposer_decode_aa(pose_embedding, packed_params):
    """VPoser.decode(z, output_type='aa') -> (1, 42, 3)."""
    w1, w2, w3, biases = packed_params
    vmem = pl.BlockSpec(memory_space=pltpu.MemorySpace.VMEM)

    flops = 2 * NUM_NEURONS * (LATENT_D + NUM_NEURONS + OUT_COLS) + 64 * OUT_COLS
    bytes_accessed = (2 * NUM_NEURONS * (LATENT_D + NUM_NEURONS + OUT_COLS)   # bf16 weights
                      + 4 * (3 * OUT_COLS + LATENT_D + 3 * LANE))             # f32 bias/in/out
    cost = pl.CostEstimate(flops=flops, transcendentals=6 * LANE,
                           bytes_accessed=bytes_accessed)

    aa_pad = pl.pallas_call(
        vposer_fused_kernel,
        out_shape=jax.ShapeDtypeStruct((3, LANE), jnp.float32),
        in_specs=[vmem] * 5,
        out_specs=vmem,
        cost_estimate=cost,
    )(pose_embedding, w1, w2, w3, biases)

    # (3, 128) -> (1, 42, 3): trivial XLA-side slice/transpose on ~1.5 KB.
    return aa_pad[:, :NUM_JOINTS].T.reshape(1, NUM_JOINTS, 3)


def vposer_predictor_forward(packed_params, pose_embedding, global_trans):
    """VPoserPredictor.get_pose() equivalent."""
    body_pose = vposer_decode_aa(pose_embedding, packed_params)   # (1, 42, 3) axis-angle
    # TODO(synk): Skeleton forward kinematics (self.ske) source is not provided in the
    # module, so we return its inputs (pose, trans) instead of fabricating joints.
    return body_pose, global_trans


# ---------------------------------------------------------------------------
# Deterministic synthetic parameters (no checkpoint loading) + pre-layout
# ---------------------------------------------------------------------------
def init_canonical_params(key):
    """VPoser decoder params in PyTorch Linear layout: W (out, in), b (out,)."""
    ks = jax.random.split(key, 6)

    def u(k, shape, fan_in):
        bound = float(fan_in) ** -0.5
        return jax.random.uniform(k, shape, jnp.float32, -bound, bound)

    return dict(
        w1=u(ks[0], (NUM_NEURONS, LATENT_D), LATENT_D),
        b1=u(ks[1], (NUM_NEURONS,), LATENT_D),
        w2=u(ks[2], (NUM_NEURONS, NUM_NEURONS), NUM_NEURONS),
        b2=u(ks[3], (NUM_NEURONS,), NUM_NEURONS),
        w3=u(ks[4], (NUM_JOINTS * 6, NUM_NEURONS), NUM_NEURONS),
        b3=u(ks[5], (NUM_JOINTS * 6,), NUM_NEURONS),
    )


def pack_params(p):
    """Pre-layout params for the fused kernel:
       * weights transposed to (in,out) and cast to bf16 (MXU-native input dtype),
       * w3/b3 columns permuted joint-major -> component-major and lane-padded to
         128 joints (width 6*128 = 768, joints 42..127 zero),
       * b1/b2/b3 packed into one (3, 768) f32 array."""
    w1 = p["w1"].T.astype(jnp.bfloat16)                                   # (32, 512)
    w2 = p["w2"].T.astype(jnp.bfloat16)                                   # (512, 512)

    w3_t = p["w3"].T                                                      # (512, 252)
    w3_cm = w3_t.reshape(NUM_NEURONS, NUM_JOINTS, 6).transpose(0, 2, 1)   # (512, 6, 42)
    w3 = jnp.zeros((NUM_NEURONS, 6, LANE), jnp.float32)
    w3 = w3.at[:, :, :NUM_JOINTS].set(w3_cm).reshape(NUM_NEURONS, OUT_COLS)
    w3 = w3.astype(jnp.bfloat16)                                          # (512, 768)

    b3_cm = p["b3"].reshape(NUM_JOINTS, 6).T                              # (6, 42)
    b3 = jnp.zeros((6, LANE), jnp.float32).at[:, :NUM_JOINTS].set(b3_cm).reshape(OUT_COLS)

    biases = jnp.zeros((3, OUT_COLS), jnp.float32)
    biases = biases.at[0, :NUM_NEURONS].set(p["b1"])
    biases = biases.at[1, :NUM_NEURONS].set(p["b2"])
    biases = biases.at[2, :].set(b3)
    return (w1, w2, w3, biases)


# ---------------------------------------------------------------------------
# Pure-JAX reference (same bf16 operand rounding as the kernel)
# ---------------------------------------------------------------------------
def _ref_rot6d_to_aa(x6):
    """ContinuousRotReprDecoder + torchgeometry rotmat->quat->aa; x6: (J, 6)."""
    m = x6.reshape(-1, 3, 2)
    a1, a2 = m[..., 0], m[..., 1]
    b1 = a1 / jnp.maximum(jnp.linalg.norm(a1, axis=-1, keepdims=True), 1e-12)
    u2 = a2 - jnp.sum(b1 * a2, axis=-1, keepdims=True) * b1
    b2 = u2 / jnp.maximum(jnp.linalg.norm(u2, axis=-1, keepdims=True), 1e-12)
    b3 = jnp.cross(b1, b2)
    # rmat_t rows are b1, b2, b3 (R columns = [b1 b2 b3], then transposed).
    m00, m01, m02 = b1[:, 0], b1[:, 1], b1[:, 2]
    m10, m11, m12 = b2[:, 0], b2[:, 1], b2[:, 2]
    m20, m21, m22 = b3[:, 0], b3[:, 1], b3[:, 2]

    c_d2, c_d0d1, c_d0nd1 = m22 < 1e-6, m00 > m11, m00 < -m11
    t0 = 1.0 + m00 - m11 - m22
    t1 = 1.0 - m00 + m11 - m22
    t2 = 1.0 - m00 - m11 + m22
    t3 = 1.0 + m00 + m11 + m22
    c0 = (c_d2 & c_d0d1).astype(jnp.float32)
    c1 = (c_d2 & ~c_d0d1).astype(jnp.float32)
    c2 = (~c_d2 & c_d0nd1).astype(jnp.float32)
    c3 = (~c_d2 & ~c_d0nd1).astype(jnp.float32)

    q0 = (m12 - m21, t0, m01 + m10, m20 + m02)
    q1 = (m20 - m02, m01 + m10, t1, m12 + m21)
    q2 = (m01 - m10, m20 + m02, m12 + m21, t2)
    q3 = (t3, m12 - m21, m20 - m02, m01 - m10)
    denom = jnp.sqrt(t0 * c0 + t1 * c1 + t2 * c2 + t3 * c3)
    qw, qx, qy, qz = [0.5 * (q0[i] * c0 + q1[i] * c1 + q2[i] * c2 + q3[i] * c3) / denom
                      for i in range(4)]

    sin_sq = qx * qx + qy * qy + qz * qz
    sin_theta = jnp.sqrt(sin_sq)
    two_theta = 2.0 * jnp.where(qw < 0.0, jnp.arctan2(-sin_theta, -qw),
                                jnp.arctan2(sin_theta, qw))
    k = jnp.where(sin_sq > 0.0, two_theta / jnp.maximum(sin_theta, 1e-30), 2.0)
    return jnp.stack([qx * k, qy * k, qz * k], axis=-1)


def reference_decode_aa(p, z):
    def bf(x):
        return x.astype(jnp.bfloat16).astype(jnp.float32)
    h = _leaky_relu(bf(z) @ bf(p["w1"]).T + p["b1"])
    h = _leaky_relu(bf(h) @ bf(p["w2"]).T + p["b2"])
    x6 = bf(h) @ bf(p["w3"]).T + p["b3"]                   # (1, 252) joint-major
    return _ref_rot6d_to_aa(x6.reshape(NUM_JOINTS, 6)).reshape(1, NUM_JOINTS, 3)


# ---------------------------------------------------------------------------
if __name__ == "__main__":
    key = jax.random.PRNGKey(0)
    pkey, zkey = jax.random.split(key)
    canonical = init_canonical_params(pkey)
    packed = pack_params(canonical)

    # Module buffers: pose_embedding (1,32) and global_trans (1,1,3).  Use a
    # small deterministic random embedding so the full MLP + rotation path is
    # exercised numerically (the registered buffer default is zeros).
    pose_embedding = 0.5 * jax.random.normal(zkey, (1, LATENT_D), jnp.float32)
    global_trans = jnp.zeros((1, 1, 3), jnp.float32)

    fwd = jax.jit(vposer_predictor_forward)
    body_pose, trans = fwd(packed, pose_embedding, global_trans)
    jax.block_until_ready(body_pose)

    assert body_pose.shape == (1, NUM_JOINTS, 3)
    assert trans.shape == (1, 1, 3)
    assert bool(jnp.all(jnp.isfinite(body_pose)))

    ref = reference_decode_aa(canonical, pose_embedding)
    max_err = float(jnp.max(jnp.abs(body_pose - ref)))
    assert max_err < 5e-3, f"mismatch vs pure-JAX reference: {max_err}"

    print("KERNEL_OK")
</pallas_src>

<mosaic_0001>
module attributes {stable_mosaic.version = 11 : i64} {
  func.func @vposer_fused_kernel(%arg0: memref<1x32xf32, #tpu.memory_space<vmem>>, %arg1: memref<32x512xbf16, #tpu.memory_space<vmem>>, %arg2: memref<512x512xbf16, #tpu.memory_space<vmem>>, %arg3: memref<512x768xbf16, #tpu.memory_space<vmem>>, %arg4: memref<3x768xf32, #tpu.memory_space<vmem>>, %arg5: memref<3x128xf32, #tpu.memory_space<vmem>>) attributes {dimension_semantics = [], scalar_prefetch = 0 : i64, scratch_operands = 0 : i64, tpu.core_type = #tpu.core_type<tc>} {
    %c0 = arith.constant 0 : index
    %c0_0 = arith.constant 0 : index
    %0 = vector.load %arg4[%c0, %c0_0] : memref<3x768xf32, #tpu.memory_space<vmem>>, vector<1x512xf32>
    %c1 = arith.constant 1 : index
    %c0_1 = arith.constant 0 : index
    %1 = vector.load %arg4[%c1, %c0_1] : memref<3x768xf32, #tpu.memory_space<vmem>>, vector<1x512xf32>
    %c2 = arith.constant 2 : index
    %c0_2 = arith.constant 0 : index
    %2 = vector.load %arg4[%c2, %c0_2] : memref<3x768xf32, #tpu.memory_space<vmem>>, vector<1x768xf32>
    %c0_3 = arith.constant 0 : index
    %c0_4 = arith.constant 0 : index
    %3 = vector.load %arg0[%c0_3, %c0_4] : memref<1x32xf32, #tpu.memory_space<vmem>>, vector<1x32xf32>
    %4 = arith.truncf %3 : vector<1x32xf32> to vector<1x32xbf16>
    %c0_5 = arith.constant 0 : index
    %c0_6 = arith.constant 0 : index
    %5 = vector.load %arg1[%c0_5, %c0_6] : memref<32x512xbf16, #tpu.memory_space<vmem>>, vector<32x512xbf16>
    %cst = arith.constant dense<0.000000e+00> : vector<1x512xf32>
    %6 = tpu.matmul %4, %5, %cst {dimension_numbers = #tpu.dot_dimension_numbers<[1], [0], [0], [1], [0, 0, 1, 1], [], []>} : vector<1x32xbf16>, vector<32x512xbf16>, vector<1x512xf32> -> vector<1x512xf32>
    %7 = arith.addf %6, %0 : vector<1x512xf32>
    %cst_7 = arith.constant 0.000000e+00 : f32
    %8 = vector.broadcast %cst_7 : f32 to vector<1x512xf32>
    %9 = arith.cmpf oge, %7, %8 : vector<1x512xf32>
    %cst_8 = arith.constant 2.000000e-01 : f32
    %10 = vector.broadcast %cst_8 : f32 to vector<1x512xf32>
    %11 = arith.mulf %10, %7 : vector<1x512xf32>
    %12 = arith.select %9, %7, %11 : vector<1x512xi1>, vector<1x512xf32>
    %13 = arith.truncf %12 : vector<1x512xf32> to vector<1x512xbf16>
    %c0_9 = arith.constant 0 : index
    %c0_10 = arith.constant 0 : index
    %14 = vector.load %arg2[%c0_9, %c0_10] : memref<512x512xbf16, #tpu.memory_space<vmem>>, vector<512x512xbf16>
    %cst_11 = arith.constant dense<0.000000e+00> : vector<1x512xf32>
    %15 = tpu.matmul %13, %14, %cst_11 {dimension_numbers = #tpu.dot_dimension_numbers<[1], [0], [0], [1], [0, 0, 1, 1], [], []>} : vector<1x512xbf16>, vector<512x512xbf16>, vector<1x512xf32> -> vector<1x512xf32>
    %16 = arith.addf %15, %1 : vector<1x512xf32>
    %cst_12 = arith.constant 0.000000e+00 : f32
    %17 = vector.broadcast %cst_12 : f32 to vector<1x512xf32>
    %18 = arith.cmpf oge, %16, %17 : vector<1x512xf32>
    %cst_13 = arith.constant 2.000000e-01 : f32
    %19 = vector.broadcast %cst_13 : f32 to vector<1x512xf32>
    %20 = arith.mulf %19, %16 : vector<1x512xf32>
    %21 = arith.select %18, %16, %20 : vector<1x512xi1>, vector<1x512xf32>
    %22 = arith.truncf %21 : vector<1x512xf32> to vector<1x512xbf16>
    %c0_14 = arith.constant 0 : index
    %c0_15 = arith.constant 0 : index
    %23 = vector.load %arg3[%c0_14, %c0_15] : memref<512x768xbf16, #tpu.memory_space<vmem>>, vector<512x768xbf16>
    %cst_16 = arith.constant dense<0.000000e+00> : vector<1x768xf32>
    %24 = tpu.matmul %22, %23, %cst_16 {dimension_numbers = #tpu.dot_dimension_numbers<[1], [0], [0], [1], [0, 0, 1, 1], [], []>} : vector<1x512xbf16>, vector<512x768xbf16>, vector<1x768xf32> -> vector<1x768xf32>
    %25 = arith.addf %24, %2 : vector<1x768xf32>
    %26 = vector.extract_strided_slice %25 {offsets = [0, 0], sizes = [1, 128], strides = [1, 1]} : vector<1x768xf32> to vector<1x128xf32>
    %27 = vector.extract_strided_slice %25 {offsets = [0, 128], sizes = [1, 128], strides = [1, 1]} : vector<1x768xf32> to vector<1x128xf32>
    %28 = vector.extract_strided_slice %25 {offsets = [0, 256], sizes = [1, 128], strides = [1, 1]} : vector<1x768xf32> to vector<1x128xf32>
    %29 = vector.extract_strided_slice %25 {offsets = [0, 384], sizes = [1, 128], strides = [1, 1]} : vector<1x768xf32> to vector<1x128xf32>
    %30 = vector.extract_strided_slice %25 {offsets = [0, 512], sizes = [1, 128], strides = [1, 1]} : vector<1x768xf32> to vector<1x128xf32>
    %31 = vector.extract_strided_slice %25 {offsets = [0, 640], sizes = [1, 128], strides = [1, 1]} : vector<1x768xf32> to vector<1x128xf32>
    %32 = arith.mulf %26, %26 : vector<1x128xf32>
    %33 = arith.mulf %28, %28 : vector<1x128xf32>
    %34 = arith.addf %32, %33 : vector<1x128xf32>
    %35 = arith.mulf %30, %30 : vector<1x128xf32>
    %36 = arith.addf %34, %35 : vector<1x128xf32>
    %cst_17 = arith.constant 1.000000e-24 : f32
    %37 = vector.broadcast %cst_17 : f32 to vector<1x128xf32>
    %38 = arith.maximumf %36, %37 : vector<1x128xf32>
    %39 = math.rsqrt %38 : vector<1x128xf32>
    %40 = arith.mulf %26, %39 : vector<1x128xf32>
    %41 = arith.mulf %28, %39 : vector<1x128xf32>
    %42 = arith.mulf %30, %39 : vector<1x128xf32>
    %43 = arith.mulf %40, %27 : vector<1x128xf32>
    %44 = arith.mulf %41, %29 : vector<1x128xf32>
    %45 = arith.addf %43, %44 : vector<1x128xf32>
    %46 = arith.mulf %42, %31 : vector<1x128xf32>
    %47 = arith.addf %45, %46 : vector<1x128xf32>
    %48 = arith.mulf %47, %40 : vector<1x128xf32>
    %49 = arith.subf %27, %48 : vector<1x128xf32>
    %50 = arith.mulf %47, %41 : vector<1x128xf32>
    %51 = arith.subf %29, %50 : vector<1x128xf32>
    %52 = arith.mulf %47, %42 : vector<1x128xf32>
    %53 = arith.subf %31, %52 : vector<1x128xf32>
    %54 = arith.mulf %49, %49 : vector<1x128xf32>
    %55 = arith.mulf %51, %51 : vector<1x128xf32>
    %56 = arith.addf %54, %55 : vector<1x128xf32>
    %57 = arith.mulf %53, %53 : vector<1x128xf32>
    %58 = arith.addf %56, %57 : vector<1x128xf32>
    %cst_18 = arith.constant 1.000000e-24 : f32
    %59 = vector.broadcast %cst_18 : f32 to vector<1x128xf32>
    %60 = arith.maximumf %58, %59 : vector<1x128xf32>
    %61 = math.rsqrt %60 : vector<1x128xf32>
    %62 = arith.mulf %49, %61 : vector<1x128xf32>
    %63 = arith.mulf %51, %61 : vector<1x128xf32>
    %64 = arith.mulf %53, %61 : vector<1x128xf32>
    %65 = arith.mulf %41, %64 : vector<1x128xf32>
    %66 = arith.mulf %42, %63 : vector<1x128xf32>
    %67 = arith.subf %65, %66 : vector<1x128xf32>
    %68 = arith.mulf %42, %62 : vector<1x128xf32>
    %69 = arith.mulf %40, %64 : vector<1x128xf32>
    %70 = arith.subf %68, %69 : vector<1x128xf32>
    %71 = arith.mulf %40, %63 : vector<1x128xf32>
    %72 = arith.mulf %41, %62 : vector<1x128xf32>
    %73 = arith.subf %71, %72 : vector<1x128xf32>
    %cst_19 = arith.constant 9.99999997E-7 : f32
    %74 = vector.broadcast %cst_19 : f32 to vector<1x128xf32>
    %75 = arith.cmpf olt, %73, %74 : vector<1x128xf32>
    %76 = arith.cmpf ogt, %40, %63 : vector<1x128xf32>
    %cst_20 = arith.constant 0.000000e+00 : f32
    %77 = vector.broadcast %cst_20 : f32 to vector<1x128xf32>
    %78 = arith.subf %77, %63 : vector<1x128xf32>
    %79 = arith.cmpf olt, %40, %78 : vector<1x128xf32>
    %cst_21 = arith.constant 1.000000e+00 : f32
    %80 = vector.broadcast %cst_21 : f32 to vector<1x128xf32>
    %81 = arith.addf %80, %40 : vector<1x128xf32>
    %82 = arith.subf %81, %63 : vector<1x128xf32>
    %83 = arith.subf %82, %73 : vector<1x128xf32>
    %cst_22 = arith.constant 1.000000e+00 : f32
    %84 = vector.broadcast %cst_22 : f32 to vector<1x128xf32>
    %85 = arith.subf %84, %40 : vector<1x128xf32>
    %86 = arith.addf %85, %63 : vector<1x128xf32>
    %87 = arith.subf %86, %73 : vector<1x128xf32>
    %cst_23 = arith.constant 1.000000e+00 : f32
    %88 = vector.broadcast %cst_23 : f32 to vector<1x128xf32>
    %89 = arith.subf %88, %40 : vector<1x128xf32>
    %90 = arith.subf %89, %63 : vector<1x128xf32>
    %91 = arith.addf %90, %73 : vector<1x128xf32>
    %cst_24 = arith.constant 1.000000e+00 : f32
    %92 = vector.broadcast %cst_24 : f32 to vector<1x128xf32>
    %93 = arith.addf %92, %40 : vector<1x128xf32>
    %94 = arith.addf %93, %63 : vector<1x128xf32>
    %95 = arith.addf %94, %73 : vector<1x128xf32>
    %96 = arith.andi %75, %76 : vector<1x128xi1>
    %97 = arith.extui %96 : vector<1x128xi1> to vector<1x128xi32>
    %98 = arith.sitofp %97 : vector<1x128xi32> to vector<1x128xf32>
    %cst_25 = arith.constant dense<true> : vector<1x128xi1>
    %99 = arith.xori %76, %cst_25 : vector<1x128xi1>
    %100 = arith.andi %75, %99 : vector<1x128xi1>
    %101 = arith.extui %100 : vector<1x128xi1> to vector<1x128xi32>
    %102 = arith.sitofp %101 : vector<1x128xi32> to vector<1x128xf32>
    %cst_26 = arith.constant dense<true> : vector<1x128xi1>
    %103 = arith.xori %75, %cst_26 : vector<1x128xi1>
    %104 = arith.andi %103, %79 : vector<1x128xi1>
    %105 = arith.extui %104 : vector<1x128xi1> to vector<1x128xi32>
    %106 = arith.sitofp %105 : vector<1x128xi32> to vector<1x128xf32>
    %cst_27 = arith.constant dense<true> : vector<1x128xi1>
    %107 = arith.xori %75, %cst_27 : vector<1x128xi1>
    %cst_28 = arith.constant dense<true> : vector<1x128xi1>
    %108 = arith.xori %79, %cst_28 : vector<1x128xi1>
    %109 = arith.andi %107, %108 : vector<1x128xi1>
    %110 = arith.extui %109 : vector<1x128xi1> to vector<1x128xi32>
    %111 = arith.sitofp %110 : vector<1x128xi32> to vector<1x128xf32>
    %112 = arith.subf %64, %70 : vector<1x128xf32>
    %113 = arith.addf %41, %62 : vector<1x128xf32>
    %114 = arith.addf %67, %42 : vector<1x128xf32>
    %115 = arith.subf %67, %42 : vector<1x128xf32>
    %116 = arith.addf %41, %62 : vector<1x128xf32>
    %117 = arith.addf %64, %70 : vector<1x128xf32>
    %118 = arith.subf %41, %62 : vector<1x128xf32>
    %119 = arith.addf %67, %42 : vector<1x128xf32>
    %120 = arith.addf %64, %70 : vector<1x128xf32>
    %121 = arith.subf %64, %70 : vector<1x128xf32>
    %122 = arith.subf %67, %42 : vector<1x128xf32>
    %123 = arith.subf %41, %62 : vector<1x128xf32>
    %124 = arith.mulf %83, %98 : vector<1x128xf32>
    %125 = arith.mulf %87, %102 : vector<1x128xf32>
    %126 = arith.addf %124, %125 : vector<1x128xf32>
    %127 = arith.mulf %91, %106 : vector<1x128xf32>
    %128 = arith.addf %126, %127 : vector<1x128xf32>
    %129 = arith.mulf %95, %111 : vector<1x128xf32>
    %130 = arith.addf %128, %129 : vector<1x128xf32>
    %131 = math.rsqrt %130 : vector<1x128xf32>
    %cst_29 = arith.constant 5.000000e-01 : f32
    %132 = vector.broadcast %cst_29 : f32 to vector<1x128xf32>
    %133 = arith.mulf %132, %131 : vector<1x128xf32>
    %134 = arith.mulf %112, %98 : vector<1x128xf32>
    %135 = arith.mulf %115, %102 : vector<1x128xf32>
    %136 = arith.addf %134, %135 : vector<1x128xf32>
    %137 = arith.mulf %118, %106 : vector<1x128xf32>
    %138 = arith.addf %136, %137 : vector<1x128xf32>
    %139 = arith.mulf %95, %111 : vector<1x128xf32>
    %140 = arith.addf %138, %139 : vector<1x128xf32>
    %141 = arith.mulf %140, %133 : vector<1x128xf32>
    %142 = arith.mulf %83, %98 : vector<1x128xf32>
    %143 = arith.mulf %116, %102 : vector<1x128xf32>
    %144 = arith.addf %142, %143 : vector<1x128xf32>
    %145 = arith.mulf %119, %106 : vector<1x128xf32>
    %146 = arith.addf %144, %145 : vector<1x128xf32>
    %147 = arith.mulf %121, %111 : vector<1x128xf32>
    %148 = arith.addf %146, %147 : vector<1x128xf32>
    %149 = arith.mulf %148, %133 : vector<1x128xf32>
    %150 = arith.mulf %113, %98 : vector<1x128xf32>
    %151 = arith.mulf %87, %102 : vector<1x128xf32>
    %152 = arith.addf %150, %151 : vector<1x128xf32>
    %153 = arith.mulf %120, %106 : vector<1x128xf32>
    %154 = arith.addf %152, %153 : vector<1x128xf32>
    %155 = arith.mulf %122, %111 : vector<1x128xf32>
    %156 = arith.addf %154, %155 : vector<1x128xf32>
    %157 = arith.mulf %156, %133 : vector<1x128xf32>
    %158 = arith.mulf %114, %98 : vector<1x128xf32>
    %159 = arith.mulf %117, %102 : vector<1x128xf32>
    %160 = arith.addf %158, %159 : vector<1x128xf32>
    %161 = arith.mulf %91, %106 : vector<1x128xf32>
    %162 = arith.addf %160, %161 : vector<1x128xf32>
    %163 = arith.mulf %123, %111 : vector<1x128xf32>
    %164 = arith.addf %162, %163 : vector<1x128xf32>
    %165 = arith.mulf %164, %133 : vector<1x128xf32>
    %166 = arith.mulf %149, %149 : vector<1x128xf32>
    %167 = arith.mulf %157, %157 : vector<1x128xf32>
    %168 = arith.addf %166, %167 : vector<1x128xf32>
    %169 = arith.mulf %165, %165 : vector<1x128xf32>
    %170 = arith.addf %168, %169 : vector<1x128xf32>
    %171 = math.sqrt %170 : vector<1x128xf32>
    %cst_30 = arith.constant 0.000000e+00 : f32
    %172 = vector.broadcast %cst_30 : f32 to vector<1x128xf32>
    %173 = arith.cmpf olt, %141, %172 : vector<1x128xf32>
    %cst_31 = arith.constant 0.000000e+00 : f32
    %174 = vector.broadcast %cst_31 : f32 to vector<1x128xf32>
    %175 = arith.subf %174, %171 : vector<1x128xf32>
    %cst_32 = arith.constant 0.000000e+00 : f32
    %176 = vector.broadcast %cst_32 : f32 to vector<1x128xf32>
    %177 = arith.subf %176, %141 : vector<1x128xf32>
    %178 = math.atan2 %175, %177 : vector<1x128xf32>
    %179 = math.atan2 %171, %141 : vector<1x128xf32>
    %180 = arith.select %173, %178, %179 : vector<1x128xi1>, vector<1x128xf32>
    %cst_33 = arith.constant 2.000000e+00 : f32
    %181 = vector.broadcast %cst_33 : f32 to vector<1x128xf32>
    %182 = arith.mulf %181, %180 : vector<1x128xf32>
    %cst_34 = arith.constant 0.000000e+00 : f32
    %183 = vector.broadcast %cst_34 : f32 to vector<1x128xf32>
    %184 = arith.cmpf ogt, %170, %183 : vector<1x128xf32>
    %cst_35 = arith.constant 1.000000e-30 : f32
    %185 = vector.broadcast %cst_35 : f32 to vector<1x128xf32>
    %186 = arith.maximumf %171, %185 : vector<1x128xf32>
    %187 = arith.divf %182, %186 : vector<1x128xf32>
    %cst_36 = arith.constant 2.000000e+00 : f32
    %188 = vector.broadcast %cst_36 : f32 to vector<1x128xf32>
    %189 = arith.select %184, %187, %188 : vector<1x128xi1>, vector<1x128xf32>
    %190 = arith.mulf %149, %189 : vector<1x128xf32>
    %c0_37 = arith.constant 0 : index
    %c0_38 = arith.constant 0 : index
    %191 = vector.load %arg5[%c0_37, %c0_38] : memref<3x128xf32, #tpu.memory_space<vmem>>, vector<1x128xf32>
    tpu.vector_store %arg5[%c0_37, %c0_38], %190 {strides = array<i32>} : memref<3x128xf32, #tpu.memory_space<vmem>>, vector<1x128xf32>,
    %192 = arith.mulf %157, %189 : vector<1x128xf32>
    %c1_39 = arith.constant 1 : index
    %c0_40 = arith.constant 0 : index
    %193 = vector.load %arg5[%c1_39, %c0_40] : memref<3x128xf32, #tpu.memory_space<vmem>>, vector<1x128xf32>
    tpu.vector_store %arg5[%c1_39, %c0_40], %192 {strides = array<i32>} : memref<3x128xf32, #tpu.memory_space<vmem>>, vector<1x128xf32>,
    %194 = arith.mulf %165, %189 : vector<1x128xf32>
    %c2_41 = arith.constant 2 : index
    %c0_42 = arith.constant 0 : index
    %195 = vector.load %arg5[%c2_41, %c0_42] : memref<3x128xf32, #tpu.memory_space<vmem>>, vector<1x128xf32>
    tpu.vector_store %arg5[%c2_41, %c0_42], %194 {strides = array<i32>} : memref<3x128xf32, #tpu.memory_space<vmem>>, vector<1x128xf32>,
    return
  }
}

</mosaic_0001>

<llo_original>
// kernel: vposer_predictor_forward.1
$region0: #{vposer_predictor_forward.1}
  #allocation0 [shape = 'u32[]', space=smem, size = 0x4, offset = 0x4, fixed_abs, tag = 'smem constant byte address 0x4 - core index']
  #allocation1 [shape = 'u32[144,128]{1,0:T(1,128)}', space=vmem, size = 0x12000, scoped, tag = 'internal scratch']
  %s0 = inlined_call_operand.vmem [shape: f32[1,32], index: 0, kind: input, shape index: {}]
  %s1 = inlined_call_operand.hbm [shape: bf16[32,512], index: 1, kind: input, shape index: {}]
  %s2 = inlined_call_operand.hbm [shape: bf16[512,512], index: 2, kind: input, shape index: {}]
  %s3 = inlined_call_operand.hbm [shape: bf16[512,768], index: 3, kind: input, shape index: {}]
  %s4 = inlined_call_operand.hbm [shape: f32[3,768], index: 4, kind: input, shape index: {}]
  %s5 = inlined_call_operand.vmem [shape: f32[3,128], index: 5, kind: output, shape index: {}]
  %s6 = sld [smem:[#allocation0]]
  $region46: #{vposer_predictor_forward.1} parent=0
    _
  %s8 = ssub.s32 1, %s6
  %s9 = scalar_select 0, %s8, %s6
  $region1: #{vposer_predictor_forward.1} parent=0
    #allocation2 [shape = 'u8[32768]{0}', space=vmem, size = 0x8000, scoped, tag = 'input window, operand 1, single buffered']
    #allocation3 [shape = 's32[1]{0}', space=sflag, size = 0x4, scoped, tag = 'scoped memory for vposer_predictor_forward.1']
    #allocation4 [shape = 'u8[524288]{0}', space=vmem, size = 0x80000, scoped, tag = 'input window, operand 2, single buffered']
    #allocation5 [shape = 's32[1]{0}', space=sflag, size = 0x4, scoped, tag = 'scoped memory for vposer_predictor_forward.1']
    #allocation6 [shape = 'u8[786432]{0}', space=vmem, size = 0xc0000, scoped, tag = 'input window, operand 3, single buffered']
    #allocation7 [shape = 'u8[12288]{0}', space=vmem, size = 0x3000, scoped, tag = 'input window, operand 4, single buffered']
    #allocation8 [shape = 's32[1]{0}', space=sflag, size = 0x4, scoped, tag = 'scoped memory for vposer_predictor_forward.1']
    %10 = vsyncpa [#allocation3], 0
    %11 = vsyncpa [#allocation5], 0
    %12 = vsyncpa [#allocation8], 0
    // Predicated region
    $region2: #{vposer_predictor_forward.1} parent=1 // pred_check
      _
    $region3: #{vposer_predictor_forward.1} parent=1 // pred_check_branch
      %14 = sbr.rel (0) target = $region5
    $region4: #{vposer_predictor_forward.1} parent=1 // pred_region
      _
    $region5: #{vposer_predictor_forward.1} parent=1 // pred_fallthru
      _
    // Predicated region
    $region6: #{vposer_predictor_forward.1} parent=1 // pred_check
      _
    $region7: #{vposer_predictor_forward.1} parent=1 // pred_check_branch
      %16 = sbr.rel (0) target = $region9
    $region8: #{vposer_predictor_forward.1} parent=1 // pred_region
      %s18 = ssub.s32 1024, 1024
      %19 = vsyncadd [#allocation3], %s18
      %s20 = sshll.u32 [#allocation2], 4
      %s21 = int_to_ptr.vmem [resolvable:$true] %s20
      %26 = dma.hbm_to_vmem [thread:$0]  %s1, 1024, %s21, [#allocation3], 256, 256, 16
    $region9: #{vposer_predictor_forward.1} parent=1 // pred_fallthru
      _
    // Predicated region
    $region10: #{vposer_predictor_forward.1} parent=1 // pred_check
      _
    $region11: #{vposer_predictor_forward.1} parent=1 // pred_check_branch
      %28 = sbr.rel (0) target = $region13
    $region12: #{vposer_predictor_forward.1} parent=1 // pred_region
      %s30 = ssub.s32 16384, 16384
      %31 = vsyncadd [#allocation5], %s30
      %s32 = sshll.u32 [#allocation4], 4
      %s33 = int_to_ptr.vmem [resolvable:$true] %s32
      %38 = dma.hbm_to_vmem [thread:$0]  %s2, 16384, %s33, [#allocation5], 256, 256, 16
    $region13: #{vposer_predictor_forward.1} parent=1 // pred_fallthru
      _
    // Predicated region
    $region14: #{vposer_predictor_forward.1} parent=1 // pred_check
      _
    $region15: #{vposer_predictor_forward.1} parent=1 // pred_check_branch
      %40 = sbr.rel (0) target = $region17
    $region16: #{vposer_predictor_forward.1} parent=1 // pred_region
      %s42 = ssub.s32 24576, 24576
      %43 = vsyncadd [#allocation5], %s42
      %s44 = sshll.u32 [#allocation6], 4
      %s45 = int_to_ptr.vmem [resolvable:$true] %s44
      %50 = dma.hbm_to_vmem [thread:$0]  %s3, 24576, %s45, [#allocation5], 384, 384, 24
    $region17: #{vposer_predictor_forward.1} parent=1 // pred_fallthru
      _
    // Predicated region
    $region18: #{vposer_predictor_forward.1} parent=1 // pred_check
      _
    $region19: #{vposer_predictor_forward.1} parent=1 // pred_check_branch
      %52 = sbr.rel (0) target = $region21
    $region20: #{vposer_predictor_forward.1} parent=1 // pred_region
      %s54 = ssub.s32 384, 384
      %55 = vsyncadd [#allocation8], %s54
      %s57 = sshll.u32 [#allocation7], 4
      %s58 = int_to_ptr.vmem [resolvable:$true] %s57
      %60 = dma.hbm_to_vmem [thread:$0]  %s4, 384, %s58, [#allocation8]
    $region21: #{vposer_predictor_forward.1} parent=1 // pred_fallthru
      _
    // Predicated region
    $region22: #{vposer_predictor_forward.1} parent=1 // pred_check
      _
    $region23: #{vposer_predictor_forward.1} parent=1 // pred_check_branch
      %62 = sbr.rel (0) target = $region25
    $region24: #{vposer_predictor_forward.1} parent=1 // pred_region
      %63 = dma.done [#allocation3], 1024
    $region25: #{vposer_predictor_forward.1} parent=1 // pred_fallthru
      _
    // Predicated region
    $region26: #{vposer_predictor_forward.1} parent=1 // pred_check
      _
    $region27: #{vposer_predictor_forward.1} parent=1 // pred_check_branch
      %65 = sbr.rel (0) target = $region29
    $region28: #{vposer_predictor_forward.1} parent=1 // pred_region
      %66 = dma.done [#allocation5], 16384
    $region29: #{vposer_predictor_forward.1} parent=1 // pred_fallthru
      _
    // Predicated region
    $region30: #{vposer_predictor_forward.1} parent=1 // pred_check
      _
    $region31: #{vposer_predictor_forward.1} parent=1 // pred_check_branch
      %68 = sbr.rel (0) target = $region33
    $region32: #{vposer_predictor_forward.1} parent=1 // pred_region
      %69 = dma.done [#allocation5], 24576
    $region33: #{vposer_predictor_forward.1} parent=1 // pred_fallthru
      _
    // Predicated region
    $region34: #{vposer_predictor_forward.1} parent=1 // pred_check
      _
    $region35: #{vposer_predictor_forward.1} parent=1 // pred_check_branch
      %71 = sbr.rel (0) target = $region37
    $region36: #{vposer_predictor_forward.1} parent=1 // pred_region
      %72 = dma.done [#allocation8], 384
    $region37: #{vposer_predictor_forward.1} parent=1 // pred_fallthru
      _
    %v74 = vld [vmem:[#allocation7] ss:$4 sm:$0xf]
    %s75 = scalar_lea.vmem [#allocation7], 1
    %v76 = vld [vmem:[%s75] ss:$4 sm:$0xf]
    %s77 = scalar_lea.vmem [#allocation7], 2
    %v78 = vld [vmem:[%s77] ss:$4 sm:$0x3f]
    %v79 = vld [vmem:[%s0] sm:$0x1]
    %v80 = vpack.c.bf16 %v79, %v79
    %v81 = vld [vmem:[#allocation2] sm:$0xff]
    %v82 = vld [vmem:[#allocation2 + $0x8] sm:$0xff]
    %v83 = vld [vmem:[#allocation2 + $0x10] sm:$0xff]
    %v84 = vld [vmem:[#allocation2 + $0x18] sm:$0xff]
    %v85 = vld [vmem:[#allocation2 + $0x20] sm:$0xff]
    %v86 = vld [vmem:[#allocation2 + $0x28] sm:$0xff]
    %v87 = vld [vmem:[#allocation2 + $0x30] sm:$0xff]
    %v88 = vld [vmem:[#allocation2 + $0x38] sm:$0xff]
    %v97 = vunpack.c.l.b16 %v81
    %v98 = vunpack.c.h.b16 %v81
    %v99 = vunpack.c.l.b16 %v82
    %v100 = vunpack.c.h.b16 %v82
    %v101 = vunpack.c.l.b16 %v83
    %v102 = vunpack.c.h.b16 %v83
    %v103 = vunpack.c.l.b16 %v84
    %v104 = vunpack.c.h.b16 %v84
    %v105 = vunpack.c.l.b16 %v85
    %v106 = vunpack.c.h.b16 %v85
    %v107 = vunpack.c.l.b16 %v86
    %v108 = vunpack.c.h.b16 %v86
    %v109 = vunpack.c.l.b16 %v87
    %v110 = vunpack.c.h.b16 %v87
    %v111 = vunpack.c.l.b16 %v88
    %v112 = vunpack.c.h.b16 %v88
    %v113 = vpack.c.b16 %v101, %v97
    %v114 = vpack.c.b16 %v102, %v98
    %v115 = vpack.c.b16 %v103, %v99
    %v116 = vpack.c.b16 %v104, %v100
    %v117 = vpack.c.b16 %v109, %v105
    %v118 = vpack.c.b16 %v110, %v106
    %v119 = vpack.c.b16 %v111, %v107
    %v120 = vpack.c.b16 %v112, %v108
    %v130 = vlaneseq
    %v131 = vshrl.u32 %v130, 7
    %v132 = vsub.s32 0, %v131
    %v133 = vrot.slane %v74, %v132
    %v134 = vlaneseq
    %v135 = vshrl.u32 %v134, 7
    %v136 = vsub.s32 1, %v135
    %v137 = vrot.slane %v74, %v136
    %v138 = vlaneseq
    %v139 = vshrl.u32 %v138, 7
    %v140 = vsub.s32 2, %v139
    %v141 = vrot.slane %v74, %v140
    %v142 = vlaneseq
    %v143 = vshrl.u32 %v142, 7
    %v144 = vsub.s32 3, %v143
    %v145 = vrot.slane %v74, %v144
    %vm150 = vcmask 261120
    %v152 = vsel %vm150, %v80, 0
    %154 = vmatprep.subr.bf16.mxu0 %v114
    %155 = vmatpush1.bf16.msra.mxu0 %v113
    %156 = vmatprep.subr.bf16.mxu0 %v118
    %157 = vmatpush1.bf16.msra.mxu0 %v117
    %158 = vmatprep.subr.bf16.mxu0 0
    %159 = vmatpush1.bf16.msra.mxu0 0
    %160 = vmatprep.subr.bf16.mxu0 0
    %161 = vmatpush1.bf16.msra.mxu0 0
    %162 = vmatprep.subr.bf16.mxu0 0
    %163 = vmatpush1.bf16.msra.mxu0 0
    %164 = vmatprep.subr.bf16.mxu0 0
    %165 = vmatpush1.bf16.msra.mxu0 0
    %166 = vmatprep.subr.bf16.mxu0 0
    %167 = vmatpush1.bf16.msra.mxu0 0
    %168 = vmatprep.subr.bf16.mxu0 0
    %169 = vmatpush1.bf16.msra.mxu0 0
    %170 = vmatprep.subr.bf16.mxu0 0
    %171 = vmatpush1.bf16.msra.mxu0 0
    %172 = vmatprep.subr.bf16.mxu0 0
    %173 = vmatpush1.bf16.msra.mxu0 0
    %174 = vmatprep.subr.bf16.mxu0 0
    %175 = vmatpush1.bf16.msra.mxu0 0
    %176 = vmatprep.subr.bf16.mxu0 0
    %177 = vmatpush1.bf16.msra.mxu0 0
    %178 = vmatprep.subr.bf16.mxu0 0
    %179 = vmatpush1.bf16.msra.mxu0 0
    %180 = vmatprep.subr.bf16.mxu0 0
    %181 = vmatpush1.bf16.msra.mxu0 0
    %182 = vmatprep.subr.bf16.mxu0 0
    %183 = vmatpush1.bf16.msra.mxu0 0
    %184 = vmatprep.subr.bf16.mxu0 0
    %185 = vmatpush1.bf16.msra.mxu0 0
    %186 = vmatprep.mubr.bf16.mxu0 0
    %187 = vmatmul.mubr.bf16.gmra.mrb[0].mxu0 %v152
    %v188 = vpop.f32.mrb[0].mxu0
    %v189 = vadd.f32 %v133, %v188
    %v190 = vpop.f32.mrb[0].mxu0
    %v191 = vadd.f32 %v137, %v190
    %v192 = vpop.f32.mrb[0].mxu0
    %v193 = vpop.f32.mrb[0].mxu0
    %194 = vdwg.mxu0
    %195 = vmatprep.subr.bf16.mxu0 %v116
    %196 = vmatpush1.bf16.msra.mxu0 %v115
    %197 = vmatprep.subr.bf16.mxu0 %v120
    %198 = vmatpush1.bf16.msra.mxu0 %v119
    %199 = vmatprep.subr.bf16.mxu0 0
    %200 = vmatpush1.bf16.msra.mxu0 0
    %201 = vmatprep.subr.bf16.mxu0 0
    %202 = vmatpush1.bf16.msra.mxu0 0
    %203 = vmatprep.subr.bf16.mxu0 0
    %204 = vmatpush1.bf16.msra.mxu0 0
    %205 = vmatprep.subr.bf16.mxu0 0
    %206 = vmatpush1.bf16.msra.mxu0 0
    %207 = vmatprep.subr.bf16.mxu0 0
    %208 = vmatpush1.bf16.msra.mxu0 0
    %209 = vmatprep.subr.bf16.mxu0 0
    %210 = vmatpush1.bf16.msra.mxu0 0
    %211 = vmatprep.subr.bf16.mxu0 0
    %212 = vmatpush1.bf16.msra.mxu0 0
    %213 = vmatprep.subr.bf16.mxu0 0
    %214 = vmatpush1.bf16.msra.mxu0 0
    %215 = vmatprep.subr.bf16.mxu0 0
    %216 = vmatpush1.bf16.msra.mxu0 0
    %217 = vmatprep.subr.bf16.mxu0 0
    %218 = vmatpush1.bf16.msra.mxu0 0
    %219 = vmatprep.subr.bf16.mxu0 0
    %220 = vmatpush1.bf16.msra.mxu0 0
    %221 = vmatprep.subr.bf16.mxu0 0
    %222 = vmatpush1.bf16.msra.mxu0 0
    %223 = vmatprep.subr.bf16.mxu0 0
    %224 = vmatpush1.bf16.msra.mxu0 0
    %225 = vmatprep.subr.bf16.mxu0 0
    %226 = vmatpush1.bf16.msra.mxu0 0
    %227 = vmatprep.mubr.bf16.mxu0 0
    %228 = vmatmul.mubr.bf16.gmra.mrb[0].mxu0 %v152
    %v229 = vpop.f32.mrb[0].mxu0
    %v230 = vadd.f32 %v141, %v229
    %v231 = vpop.f32.mrb[0].mxu0
    %v232 = vadd.f32 %v145, %v231
    %v233 = vpop.f32.mrb[0].mxu0
    %v234 = vpop.f32.mrb[0].mxu0
    %235 = vdwg.mxu0
    %vm236 = vcmp.ge.f32.partialorder %v189, 0.0
    %vm237 = vcmp.ge.f32.partialorder %v191, 0.0
    %vm238 = vcmp.ge.f32.partialorder %v230, 0.0
    %vm239 = vcmp.ge.f32.partialorder %v232, 0.0
    %v240 = vmul.f32 %v189, 0.2
    %v241 = vmul.f32 %v191, 0.2
    %v242 = vmul.f32 %v230, 0.2
    %v243 = vmul.f32 %v232, 0.2
    %v244 = vsel %vm236, %v189, %v240
    %v245 = vsel %vm237, %v191, %v241
    %v246 = vsel %vm238, %v230, %v242
    %v247 = vsel %vm239, %v232, %v243
    %v248 = vpack.c.bf16 %v244, %v244
    %v249 = vpack.c.bf16 %v245, %v245
    %v250 = vpack.c.bf16 %v246, %v246
    %v251 = vpack.c.bf16 %v247, %v247
    %v252 = vld [vmem:[#allocation4] sm:$0xff]
    %v253 = vld [vmem:[#allocation4 + $0x8] sm:$0xff]
    %v254 = vld [vmem:[#allocation4 + $0x10] sm:$0xff]
    %v255 = vld [vmem:[#allocation4 + $0x18] sm:$0xff]
    %v256 = vld [vmem:[#allocation4 + $0x20] sm:$0xff]
    %v257 = vld [vmem:[#allocation4 + $0x28] sm:$0xff]
    %v258 = vld [vmem:[#allocation4 + $0x30] sm:$0xff]
    %v259 = vld [vmem:[#allocation4 + $0x38] sm:$0xff]
    %v260 = vld [vmem:[#allocation4 + $0x40] sm:$0xff]
    %v261 = vld [vmem:[#allocation4 + $0x48] sm:$0xff]
    %v262 = vld [vmem:[#allocation4 + $0x50] sm:$0xff]
    %v263 = vld [vmem:[#allocation4 + $0x58] sm:$0xff]
    %v264 = vld [vmem:[#allocation4 + $0x60] sm:$0xff]
    %v265 = vld [vmem:[#allocation4 + $0x68] sm:$0xff]
    %v266 = vld [vmem:[#allocation4 + $0x70] sm:$0xff]
    %v267 = vld [vmem:[#allocation4 + $0x78] sm:$0xff]
    %v268 = vld [vmem:[#allocation4 + $0x80] sm:$0xff]
    %v269 = vld [vmem:[#allocation4 + $0x88] sm:$0xff]
    %v270 = vld [vmem:[#allocation4 + $0x90] sm:$0xff]
    %v271 = vld [vmem:[#allocation4 + $0x98] sm:$0xff]
    %v272 = vld [vmem:[#allocation4 + $0xa0] sm:$0xff]
    %v273 = vld [vmem:[#allocation4 + $0xa8] sm:$0xff]
    %v274 = vld [vmem:[#allocation4 + $0xb0] sm:$0xff]
    %v275 = vld [vmem:[#allocation4 + $0xb8] sm:$0xff]
    %v276 = vld [vmem:[#allocation4 + $0xc0] sm:$0xff]
    %v277 = vld [vmem:[#allocation4 + $0xc8] sm:$0xff]
    %v278 = vld [vmem:[#allocation4 + $0xd0] sm:$0xff]
    %v279 = vld [vmem:[#allocation4 + $0xd8] sm:$0xff]
    %v280 = vld [vmem:[#allocation4 + $0xe0] sm:$0xff]
    %v281 = vld [vmem:[#allocation4 + $0xe8] sm:$0xff]
    %v282 = vld [vmem:[#allocation4 + $0xf0] sm:$0xff]
    %v283 = vld [vmem:[#allocation4 + $0xf8] sm:$0xff]
    %v284 = vld [vmem:[#allocation4 + $0x100] sm:$0xff]
    %v285 = vld [vmem:[#allocation4 + $0x108] sm:$0xff]
    %v286 = vld [vmem:[#allocation4 + $0x110] sm:$0xff]
    %v287 = vld [vmem:[#allocation4 + $0x118] sm:$0xff]
    %v288 = vld [vmem:[#allocation4 + $0x120] sm:$0xff]
    %v289 = vld [vmem:[#allocation4 + $0x128] sm:$0xff]
    %v290 = vld [vmem:[#allocation4 + $0x130] sm:$0xff]
    %v291 = vld [vmem:[#allocation4 + $0x138] sm:$0xff]
    %v292 = vld [vmem:[#allocation4 + $0x140] sm:$0xff]
    %v293 = vld [vmem:[#allocation4 + $0x148] sm:$0xff]
    %v294 = vld [vmem:[#allocation4 + $0x150] sm:$0xff]
    %v295 = vld [vmem:[#allocation4 + $0x158] sm:$0xff]
    %v296 = vld [vmem:[#allocation4 + $0x160] sm:$0xff]
    %v297 = vld [vmem:[#allocation4 + $0x168] sm:$0xff]
    %v298 = vld [vmem:[#allocation4 + $0x170] sm:$0xff]
    %v299 = vld [vmem:[#allocation4 + $0x178] sm:$0xff]
    %v300 = vld [vmem:[#allocation4 + $0x180] sm:$0xff]
    %v301 = vld [vmem:[#allocation4 + $0x188] sm:$0xff]
    %v302 = vld [vmem:[#allocation4 + $0x190] sm:$0xff]
    %v303 = vld [vmem:[#allocation4 + $0x198] sm:$0xff]
    %v304 = vld [vmem:[#allocation4 + $0x1a0] sm:$0xff]
    %v305 = vld [vmem:[#allocation4 + $0x1a8] sm:$0xff]
    %v306 = vld [vmem:[#allocation4 + $0x1b0] sm:$0xff]
    %v307 = vld [vmem:[#allocation4 + $0x1b8] sm:$0xff]
    %v308 = vld [vmem:[#allocation4 + $0x1c0] sm:$0xff]
    %v309 = vld [vmem:[#allocation4 + $0x1c8] sm:$0xff]
    %v310 = vld [vmem:[#allocation4 + $0x1d0] sm:$0xff]
    %v311 = vld [vmem:[#allocation4 + $0x1d8] sm:$0xff]
    %v312 = vld [vmem:[#allocation4 + $0x1e0] sm:$0xff]
    %v313 = vld [vmem:[#allocation4 + $0x1e8] sm:$0xff]
    %v314 = vld [vmem:[#allocation4 + $0x1f0] sm:$0xff]
    %v315 = vld [vmem:[#allocation4 + $0x1f8] sm:$0xff]
    %v316 = vld [vmem:[#allocation4 + $0x200] sm:$0xff]
    %v317 = vld [vmem:[#allocation4 + $0x208] sm:$0xff]
    %v318 = vld [vmem:[#allocation4 + $0x210] sm:$0xff]
    %v319 = vld [vmem:[#allocation4 + $0x218] sm:$0xff]
    %v320 = vld [vmem:[#allocation4 + $0x220] sm:$0xff]
    %v321 = vld [vmem:[#allocation4 + $0x228] sm:$0xff]
    %v322 = vld [vmem:[#allocation4 + $0x230] sm:$0xff]
    %v323 = vld [vmem:[#allocation4 + $0x238] sm:$0xff]
    %v324 = vld [vmem:[#allocation4 + $0x240] sm:$0xff]
    %v325 = vld [vmem:[#allocation4 + $0x248] sm:$0xff]
    %v326 = vld [vmem:[#allocation4 + $0x250] sm:$0xff]
    %v327 = vld [vmem:[#allocation4 + $0x258] sm:$0xff]
    %v328 = vld [vmem:[#allocation4 + $0x260] sm:$0xff]
    %v329 = vld [vmem:[#allocation4 + $0x268] sm:$0xff]
    %v330 = vld [vmem:[#allocation4 + $0x270] sm:$0xff]
    %v331 = vld [vmem:[#allocation4 + $0x278] sm:$0xff]
    %v332 = vld [vmem:[#allocation4 + $0x280] sm:$0xff]
    %v333 = vld [vmem:[#allocation4 + $0x288] sm:$0xff]
    %v334 = vld [vmem:[#allocation4 + $0x290] sm:$0xff]
    %v335 = vld [vmem:[#allocation4 + $0x298] sm:$0xff]
    %v336 = vld [vmem:[#allocation4 + $0x2a0] sm:$0xff]
    %v337 = vld [vmem:[#allocation4 + $0x2a8] sm:$0xff]
    %v338 = vld [vmem:[#allocation4 + $0x2b0] sm:$0xff]
    %v339 = vld [vmem:[#allocation4 + $0x2b8] sm:$0xff]
    %v340 = vld [vmem:[#allocation4 + $0x2c0] sm:$0xff]
    %v341 = vld [vmem:[#allocation4 + $0x2c8] sm:$0xff]
    %v342 = vld [vmem:[#allocation4 + $0x2d0] sm:$0xff]
    %v343 = vld [vmem:[#allocation4 + $0x2d8] sm:$0xff]
    %v344 = vld [vmem:[#allocation4 + $0x2e0] sm:$0xff]
    %v345 = vld [vmem:[#allocation4 + $0x2e8] sm:$0xff]
    %v346 = vld [vmem:[#allocation4 + $0x2f0] sm:$0xff]
    %v347 = vld [vmem:[#allocation4 + $0x2f8] sm:$0xff]
    %v348 = vld [vmem:[#allocation4 + $0x300] sm:$0xff]
    %v349 = vld [vmem:[#allocation4 + $0x308] sm:$0xff]
    %v350 = vld [vmem:[#allocation4 + $0x310] sm:$0xff]
    %v351 = vld [vmem:[#allocation4 + $0x318] sm:$0xff]
    %v352 = vld [vmem:[#allocation4 + $0x320] sm:$0xff]
    %v353 = vld [vmem:[#allocation4 + $0x328] sm:$0xff]
    %v354 = vld [vmem:[#allocation4 + $0x330] sm:$0xff]
    %v355 = vld [vmem:[#allocation4 + $0x338] sm:$0xff]
    %v356 = vld [vmem:[#allocation4 + $0x340] sm:$0xff]
    %v357 = vld [vmem:[#allocation4 + $0x348] sm:$0xff]
    %v358 = vld [vmem:[#allocation4 + $0x350] sm:$0xff]
    %v359 = vld [vmem:[#allocation4 + $0x358] sm:$0xff]
    %v360 = vld [vmem:[#allocation4 + $0x360] sm:$0xff]
    %v361 = vld [vmem:[#allocation4 + $0x368] sm:$0xff]
    %v362 = vld [vmem:[#allocation4 + $0x370] sm:$0xff]
    %v363 = vld [vmem:[#allocation4 + $0x378] sm:$0xff]
    %v364 = vld [vmem:[#allocation4 + $0x380] sm:$0xff]
    %v365 = vld [vmem:[#allocation4 + $0x388] sm:$0xff]
    %v366 = vld [vmem:[#allocation4 + $0x390] sm:$0xff]
    %v367 = vld [vmem:[#allocation4 + $0x398] sm:$0xff]
    %v368 = vld [vmem:[#allocation4 + $0x3a0] sm:$0xff]
    %v369 = vld [vmem:[#allocation4 + $0x3a8] sm:$0xff]
    %v370 = vld [vmem:[#allocation4 + $0x3b0] sm:$0xff]
    %v371 = vld [vmem:[#allocation4 + $0x3b8] sm:$0xff]
    %v372 = vld [vmem:[#allocation4 + $0x3c0] sm:$0xff]
    %v373 = vld [vmem:[#allocation4 + $0x3c8] sm:$0xff]
    %v374 = vld [vmem:[#allocation4 + $0x3d0] sm:$0xff]
    %v375 = vld [vmem:[#allocation4 + $0x3d8] sm:$0xff]
    %v376 = vld [vmem:[#allocation4 + $0x3e0] sm:$0xff]
    %v377 = vld [vmem:[#allocation4 + $0x3e8] sm:$0xff]
    %v378 = vld [vmem:[#allocation4 + $0x3f0] sm:$0xff]
    %v379 = vld [vmem:[#allocation4 + $0x3f8] sm:$0xff]
    %v508 = vunpack.c.l.b16 %v252
    %v509 = vunpack.c.h.b16 %v252
    %v510 = vunpack.c.l.b16 %v253
    %v511 = vunpack.c.h.b16 %v253
    %v512 = vunpack.c.l.b16 %v254
    %v513 = vunpack.c.h.b16 %v254
    %v514 = vunpack.c.l.b16 %v255
    %v515 = vunpack.c.h.b16 %v255
    %v516 = vunpack.c.l.b16 %v256
    %v517 = vunpack.c.h.b16 %v256
    %v518 = vunpack.c.l.b16 %v257
    %v519 = vunpack.c.h.b16 %v257
    %v520 = vunpack.c.l.b16 %v258
    %v521 = vunpack.c.h.b16 %v258
    %v522 = vunpack.c.l.b16 %v259
    %v523 = vunpack.c.h.b16 %v259
    %v524 = vunpack.c.l.b16 %v260
    %v525 = vunpack.c.h.b16 %v260
    %v526 = vunpack.c.l.b16 %v261
    %v527 = vunpack.c.h.b16 %v261
    %v528 = vunpack.c.l.b16 %v262
    %v529 = vunpack.c.h.b16 %v262
    %v530 = vunpack.c.l.b16 %v263
    %v531 = vunpack.c.h.b16 %v263
    %v532 = vunpack.c.l.b16 %v264
    %v533 = vunpack.c.h.b16 %v264
    %v534 = vunpack.c.l.b16 %v265
    %v535 = vunpack.c.h.b16 %v265
    %v536 = vunpack.c.l.b16 %v266
    %v537 = vunpack.c.h.b16 %v266
    %v538 = vunpack.c.l.b16 %v267
    %v539 = vunpack.c.h.b16 %v267
    %v540 = vunpack.c.l.b16 %v268
    %v541 = vunpack.c.h.b16 %v268
    %v542 = vunpack.c.l.b16 %v269
    %v543 = vunpack.c.h.b16 %v269
    %v544 = vunpack.c.l.b16 %v270
    %v545 = vunpack.c.h.b16 %v270
    %v546 = vunpack.c.l.b16 %v271
    %v547 = vunpack.c.h.b16 %v271
    %v548 = vunpack.c.l.b16 %v272
    %v549 = vunpack.c.h.b16 %v272
    %v550 = vunpack.c.l.b16 %v273
    %v551 = vunpack.c.h.b16 %v273
    %v552 = vunpack.c.l.b16 %v274
    %v553 = vunpack.c.h.b16 %v274
    %v554 = vunpack.c.l.b16 %v275
    %v555 = vunpack.c.h.b16 %v275
    %v556 = vunpack.c.l.b16 %v276
    %v557 = vunpack.c.h.b16 %v276
    %v558 = vunpack.c.l.b16 %v277
    %v559 = vunpack.c.h.b16 %v277
    %v560 = vunpack.c.l.b16 %v278
    %v561 = vunpack.c.h.b16 %v278
    %v562 = vunpack.c.l.b16 %v279
    %v563 = vunpack.c.h.b16 %v279
    %v564 = vunpack.c.l.b16 %v280
    %v565 = vunpack.c.h.b16 %v280
    %v566 = vunpack.c.l.b16 %v281
    %v567 = vunpack.c.h.b16 %v281
    %v568 = vunpack.c.l.b16 %v282
    %v569 = vunpack.c.h.b16 %v282
    %v570 = vunpack.c.l.b16 %v283
    %v571 = vunpack.c.h.b16 %v283
    %v572 = vunpack.c.l.b16 %v284
    %v573 = vunpack.c.h.b16 %v284
    %v574 = vunpack.c.l.b16 %v285
    %v575 = vunpack.c.h.b16 %v285
    %v576 = vunpack.c.l.b16 %v286
    %v577 = vunpack.c.h.b16 %v286
    %v578 = vunpack.c.l.b16 %v287
    %v579 = vunpack.c.h.b16 %v287
    %v580 = vunpack.c.l.b16 %v288
    %v581 = vunpack.c.h.b16 %v288
    %v582 = vunpack.c.l.b16 %v289
    %v583 = vunpack.c.h.b16 %v289
    %v584 = vunpack.c.l.b16 %v290
    %v585 = vunpack.c.h.b16 %v290
    %v586 = vunpack.c.l.b16 %v291
    %v587 = vunpack.c.h.b16 %v291
    %v588 = vunpack.c.l.b16 %v292
    %v589 = vunpack.c.h.b16 %v292
    %v590 = vunpack.c.l.b16 %v293
    %v591 = vunpack.c.h.b16 %v293
    %v592 = vunpack.c.l.b16 %v294
    %v593 = vunpack.c.h.b16 %v294
    %v594 = vunpack.c.l.b16 %v295
    %v595 = vunpack.c.h.b16 %v295
    %v596 = vunpack.c.l.b16 %v296
    %v597 = vunpack.c.h.b16 %v296
    %v598 = vunpack.c.l.b16 %v297
    %v599 = vunpack.c.h.b16 %v297
    %v600 = vunpack.c.l.b16 %v298
    %v601 = vunpack.c.h.b16 %v298
    %v602 = vunpack.c.l.b16 %v299
    %v603 = vunpack.c.h.b16 %v299
    %v604 = vunpack.c.l.b16 %v300
    %v605 = vunpack.c.h.b16 %v300
    %v606 = vunpack.c.l.b16 %v301
    %v607 = vunpack.c.h.b16 %v301
    %v608 = vunpack.c.l.b16 %v302
    %v609 = vunpack.c.h.b16 %v302
    %v610 = vunpack.c.l.b16 %v303
    %v611 = vunpack.c.h.b16 %v303
    %v612 = vunpack.c.l.b16 %v304
    %v613 = vunpack.c.h.b16 %v304
    %v614 = vunpack.c.l.b16 %v305
    %v615 = vunpack.c.h.b16 %v305
    %v616 = vunpack.c.l.b16 %v306
    %v617 = vunpack.c.h.b16 %v306
    %v618 = vunpack.c.l.b16 %v307
    %v619 = vunpack.c.h.b16 %v307
    %v620 = vunpack.c.l.b16 %v308
    %v621 = vunpack.c.h.b16 %v308
    %v622 = vunpack.c.l.b16 %v309
    %v623 = vunpack.c.h.b16 %v309
    %v624 = vunpack.c.l.b16 %v310
    %v625 = vunpack.c.h.b16 %v310
    %v626 = vunpack.c.l.b16 %v311
    %v627 = vunpack.c.h.b16 %v311
    %v628 = vunpack.c.l.b16 %v312
    %v629 = vunpack.c.h.b16 %v312
    %v630 = vunpack.c.l.b16 %v313
    %v631 = vunpack.c.h.b16 %v313
    %v632 = vunpack.c.l.b16 %v314
    %v633 = vunpack.c.h.b16 %v314
    %v634 = vunpack.c.l.b16 %v315
    %v635 = vunpack.c.h.b16 %v315
    %v636 = vunpack.c.l.b16 %v316
    %v637 = vunpack.c.h.b16 %v316
    %v638 = vunpack.c.l.b16 %v317
    %v639 = vunpack.c.h.b16 %v317
    %v640 = vunpack.c.l.b16 %v318
    %v641 = vunpack.c.h.b16 %v318
    %v642 = vunpack.c.l.b16 %v319
    %v643 = vunpack.c.h.b16 %v319
    %v644 = vunpack.c.l.b16 %v320
    %v645 = vunpack.c.h.b16 %v320
    %v646 = vunpack.c.l.b16 %v321
    %v647 = vunpack.c.h.b16 %v321
    %v648 = vunpack.c.l.b16 %v322
    %v649 = vunpack.c.h.b16 %v322
    %v650 = vunpack.c.l.b16 %v323
    %v651 = vunpack.c.h.b16 %v323
    %v652 = vunpack.c.l.b16 %v324
    %v653 = vunpack.c.h.b16 %v324
    %v654 = vunpack.c.l.b16 %v325
    %v655 = vunpack.c.h.b16 %v325
    %v656 = vunpack.c.l.b16 %v326
    %v657 = vunpack.c.h.b16 %v326
    %v658 = vunpack.c.l.b16 %v327
    %v659 = vunpack.c.h.b16 %v327
    %v660 = vunpack.c.l.b16 %v328
    %v661 = vunpack.c.h.b16 %v328
    %v662 = vunpack.c.l.b16 %v329
    %v663 = vunpack.c.h.b16 %v329
    %v664 = vunpack.c.l.b16 %v330
    %v665 = vunpack.c.h.b16 %v330
    %v666 = vunpack.c.l.b16 %v331
    %v667 = vunpack.c.h.b16 %v331
    %v668 = vunpack.c.l.b16 %v332
    %v669 = vunpack.c.h.b16 %v332
    %v670 = vunpack.c.l.b16 %v333
    %v671 = vunpack.c.h.b16 %v333
    %v672 = vunpack.c.l.b16 %v334
    %v673 = vunpack.c.h.b16 %v334
    %v674 = vunpack.c.l.b16 %v335
    %v675 = vunpack.c.h.b16 %v335
    %v676 = vunpack.c.l.b16 %v336
    %v677 = vunpack.c.h.b16 %v336
    %v678 = vunpack.c.l.b16 %v337
    %v679 = vunpack.c.h.b16 %v337
    %v680 = vunpack.c.l.b16 %v338
    %v681 = vunpack.c.h.b16 %v338
    %v682 = vunpack.c.l.b16 %v339
    %v683 = vunpack.c.h.b16 %v339
    %v684 = vunpack.c.l.b16 %v340
    %v685 = vunpack.c.h.b16 %v340
    %v686 = vunpack.c.l.b16 %v341
    %v687 = vunpack.c.h.b16 %v341
    %v688 = vunpack.c.l.b16 %v342
    %v689 = vunpack.c.h.b16 %v342
    %v690 = vunpack.c.l.b16 %v343
    %v691 = vunpack.c.h.b16 %v343
    %v692 = vunpack.c.l.b16 %v344
    %v693 = vunpack.c.h.b16 %v344
    %v694 = vunpack.c.l.b16 %v345
    %v695 = vunpack.c.h.b16 %v345
    %v696 = vunpack.c.l.b16 %v346
    %v697 = vunpack.c.h.b16 %v346
    %v698 = vunpack.c.l.b16 %v347
    %v699 = vunpack.c.h.b16 %v347
    %v700 = vunpack.c.l.b16 %v348
    %v701 = vunpack.c.h.b16 %v348
    %v702 = vunpack.c.l.b16 %v349
    %v703 = vunpack.c.h.b16 %v349
    %v704 = vunpack.c.l.b16 %v350
    %v705 = vunpack.c.h.b16 %v350
    %v706 = vunpack.c.l.b16 %v351
    %v707 = vunpack.c.h.b16 %v351
    %v708 = vunpack.c.l.b16 %v352
    %v709 = vunpack.c.h.b16 %v352
    %v710 = vunpack.c.l.b16 %v353
    %v711 = vunpack.c.h.b16 %v353
    %v712 = vunpack.c.l.b16 %v354
    %v713 = vunpack.c.h.b16 %v354
    %v714 = vunpack.c.l.b16 %v355
    %v715 = vunpack.c.h.b16 %v355
    %v716 = vunpack.c.l.b16 %v356
    %v717 = vunpack.c.h.b16 %v356
    %v718 = vunpack.c.l.b16 %v357
    %v719 = vunpack.c.h.b16 %v357
    %v720 = vunpack.c.l.b16 %v358
    %v721 = vunpack.c.h.b16 %v358
    %v722 = vunpack.c.l.b16 %v359
    %v723 = vunpack.c.h.b16 %v359
    %v724 = vunpack.c.l.b16 %v360
    %v725 = vunpack.c.h.b16 %v360
    %v726 = vunpack.c.l.b16 %v361
    %v727 = vunpack.c.h.b16 %v361
    %v728 = vunpack.c.l.b16 %v362
    %v729 = vunpack.c.h.b16 %v362
    %v730 = vunpack.c.l.b16 %v363
    %v731 = vunpack.c.h.b16 %v363
    %v732 = vunpack.c.l.b16 %v364
    %v733 = vunpack.c.h.b16 %v364
    %v734 = vunpack.c.l.b16 %v365
    %v735 = vunpack.c.h.b16 %v365
    %v736 = vunpack.c.l.b16 %v366
    %v737 = vunpack.c.h.b16 %v366
    %v738 = vunpack.c.l.b16 %v367
    %v739 = vunpack.c.h.b16 %v367
    %v740 = vunpack.c.l.b16 %v368
    %v741 = vunpack.c.h.b16 %v368
    %v742 = vunpack.c.l.b16 %v369
    %v743 = vunpack.c.h.b16 %v369
    %v744 = vunpack.c.l.b16 %v370
    %v745 = vunpack.c.h.b16 %v370
    %v746 = vunpack.c.l.b16 %v371
    %v747 = vunpack.c.h.b16 %v371
    %v748 = vunpack.c.l.b16 %v372
    %v749 = vunpack.c.h.b16 %v372
    %v750 = vunpack.c.l.b16 %v373
    %v751 = vunpack.c.h.b16 %v373
    %v752 = vunpack.c.l.b16 %v374
    %v753 = vunpack.c.h.b16 %v374
    %v754 = vunpack.c.l.b16 %v375
    %v755 = vunpack.c.h.b16 %v375
    %v756 = vunpack.c.l.b16 %v376
    %v757 = vunpack.c.h.b16 %v376
    %v758 = vunpack.c.l.b16 %v377
    %v759 = vunpack.c.h.b16 %v377
    %v760 = vunpack.c.l.b16 %v378
    %v761 = vunpack.c.h.b16 %v378
    %v762 = vunpack.c.l.b16 %v379
    %v763 = vunpack.c.h.b16 %v379
    %v764 = vpack.c.b16 %v512, %v508
    %v765 = vpack.c.b16 %v513, %v509
    %v766 = vpack.c.b16 %v514, %v510
    %v767 = vpack.c.b16 %v515, %v511
    %v768 = vpack.c.b16 %v520, %v516
    %v769 = vpack.c.b16 %v521, %v517
    %v770 = vpack.c.b16 %v522, %v518
    %v771 = vpack.c.b16 %v523, %v519
    %v772 = vpack.c.b16 %v528, %v524
    %v773 = vpack.c.b16 %v529, %v525
    %v774 = vpack.c.b16 %v530, %v526
    %v775 = vpack.c.b16 %v531, %v527
    %v776 = vpack.c.b16 %v536, %v532
    %v777 = vpack.c.b16 %v537, %v533
    %v778 = vpack.c.b16 %v538, %v534
    %v779 = vpack.c.b16 %v539, %v535
    %v780 = vpack.c.b16 %v544, %v540
    %v781 = vpack.c.b16 %v545, %v541
    %v782 = vpack.c.b16 %v546, %v542
    %v783 = vpack.c.b16 %v547, %v543
    %v784 = vpack.c.b16 %v552, %v548
    %v785 = vpack.c.b16 %v553, %v549
    %v786 = vpack.c.b16 %v554, %v550
    %v787 = vpack.c.b16 %v555, %v551
    %v788 = vpack.c.b16 %v560, %v556
    %v789 = vpack.c.b16 %v561, %v557
    %v790 = vpack.c.b16 %v562, %v558
    %v791 = vpack.c.b16 %v563, %v559
    %v792 = vpack.c.b16 %v568, %v564
    %v793 = vpack.c.b16 %v569, %v565
    %v794 = vpack.c.b16 %v570, %v566
    %v795 = vpack.c.b16 %v571, %v567
    %v796 = vpack.c.b16 %v576, %v572
    %v797 = vpack.c.b16 %v577, %v573
    %v798 = vpack.c.b16 %v578, %v574
    %v799 = vpack.c.b16 %v579, %v575
    %v800 = vpack.c.b16 %v584, %v580
    %v801 = vpack.c.b16 %v585, %v581
    %v802 = vpack.c.b16 %v586, %v582
    %v803 = vpack.c.b16 %v587, %v583
    %v804 = vpack.c.b16 %v592, %v588
    %v805 = vpack.c.b16 %v593, %v589
    %v806 = vpack.c.b16 %v594, %v590
    %v807 = vpack.c.b16 %v595, %v591
    %v808 = vpack.c.b16 %v600, %v596
    %v809 = vpack.c.b16 %v601, %v597
    %v810 = vpack.c.b16 %v602, %v598
    %v811 = vpack.c.b16 %v603, %v599
    %v812 = vpack.c.b16 %v608, %v604
    %v813 = vpack.c.b16 %v609, %v605
    %v814 = vpack.c.b16 %v610, %v606
    %v815 = vpack.c.b16 %v611, %v607
    %v816 = vpack.c.b16 %v616, %v612
    %v817 = vpack.c.b16 %v617, %v613
    %v818 = vpack.c.b16 %v618, %v614
    %v819 = vpack.c.b16 %v619, %v615
    %v820 = vpack.c.b16 %v624, %v620
    %v821 = vpack.c.b16 %v625, %v621
    %v822 = vpack.c.b16 %v626, %v622
    %v823 = vpack.c.b16 %v627, %v623
    %v824 = vpack.c.b16 %v632, %v628
    %v825 = vpack.c.b16 %v633, %v629
    %v826 = vpack.c.b16 %v634, %v630
    %v827 = vpack.c.b16 %v635, %v631
    %v828 = vpack.c.b16 %v640, %v636
    %v829 = vpack.c.b16 %v641, %v637
    %v830 = vpack.c.b16 %v642, %v638
    %v831 = vpack.c.b16 %v643, %v639
    %v832 = vpack.c.b16 %v648, %v644
    %v833 = vpack.c.b16 %v649, %v645
    %v834 = vpack.c.b16 %v650, %v646
    %v835 = vpack.c.b16 %v651, %v647
    %v836 = vpack.c.b16 %v656, %v652
    %v837 = vpack.c.b16 %v657, %v653
    %v838 = vpack.c.b16 %v658, %v654
    %v839 = vpack.c.b16 %v659, %v655
    %v840 = vpack.c.b16 %v664, %v660
    %v841 = vpack.c.b16 %v665, %v661
    %v842 = vpack.c.b16 %v666, %v662
    %v843 = vpack.c.b16 %v667, %v663
    %v844 = vpack.c.b16 %v672, %v668
    %v845 = vpack.c.b16 %v673, %v669
    %v846 = vpack.c.b16 %v674, %v670
    %v847 = vpack.c.b16 %v675, %v671
    %v848 = vpack.c.b16 %v680, %v676
    %v849 = vpack.c.b16 %v681, %v677
    %v850 = vpack.c.b16 %v682, %v678
    %v851 = vpack.c.b16 %v683, %v679
    %v852 = vpack.c.b16 %v688, %v684
    %v853 = vpack.c.b16 %v689, %v685
    %v854 = vpack.c.b16 %v690, %v686
    %v855 = vpack.c.b16 %v691, %v687
    %v856 = vpack.c.b16 %v696, %v692
    %v857 = vpack.c.b16 %v697, %v693
    %v858 = vpack.c.b16 %v698, %v694
    %v859 = vpack.c.b16 %v699, %v695
    %v860 = vpack.c.b16 %v704, %v700
    %v861 = vpack.c.b16 %v705, %v701
    %v862 = vpack.c.b16 %v706, %v702
    %v863 = vpack.c.b16 %v707, %v703
    %v864 = vpack.c.b16 %v712, %v708
    %v865 = vpack.c.b16 %v713, %v709
    %v866 = vpack.c.b16 %v714, %v710
    %v867 = vpack.c.b16 %v715, %v711
    %v868 = vpack.c.b16 %v720, %v716
    %v869 = vpack.c.b16 %v721, %v717
    %v870 = vpack.c.b16 %v722, %v718
    %v871 = vpack.c.b16 %v723, %v719
    %v872 = vpack.c.b16 %v728, %v724
    %v873 = vpack.c.b16 %v729, %v725
    %v874 = vpack.c.b16 %v730, %v726
    %v875 = vpack.c.b16 %v731, %v727
    %v876 = vpack.c.b16 %v736, %v732
    %v877 = vpack.c.b16 %v737, %v733
    %v878 = vpack.c.b16 %v738, %v734
    %v879 = vpack.c.b16 %v739, %v735
    %v880 = vpack.c.b16 %v744, %v740
    %v881 = vpack.c.b16 %v745, %v741
    %v882 = vpack.c.b16 %v746, %v742
    %v883 = vpack.c.b16 %v747, %v743
    %v884 = vpack.c.b16 %v752, %v748
    %v885 = vpack.c.b16 %v753, %v749
    %v886 = vpack.c.b16 %v754, %v750
    %v887 = vpack.c.b16 %v755, %v751
    %v888 = vpack.c.b16 %v760, %v756
    %v889 = vpack.c.b16 %v761, %v757
    %v890 = vpack.c.b16 %v762, %v758
    %v891 = vpack.c.b16 %v763, %v759
    %v1021 = vlaneseq
    %v1022 = vshrl.u32 %v1021, 7
    %v1023 = vsub.s32 0, %v1022
    %v1024 = vrot.slane %v76, %v1023
    %v1025 = vlaneseq
    %v1026 = vshrl.u32 %v1025, 7
    %v1027 = vsub.s32 1, %v1026
    %v1028 = vrot.slane %v76, %v1027
    %v1029 = vlaneseq
    %v1030 = vshrl.u32 %v1029, 7
    %v1031 = vsub.s32 2, %v1030
    %v1032 = vrot.slane %v76, %v1031
    %v1033 = vlaneseq
    %v1034 = vshrl.u32 %v1033, 7
    %v1035 = vsub.s32 3, %v1034
    %v1036 = vrot.slane %v76, %v1035
    %1041 = vmatprep.subr.bf16.mxu0 %v765
    %1042 = vmatpush1.bf16.msra.mxu0 %v764
    %1043 = vmatprep.subr.bf16.mxu0 %v769
    %1044 = vmatpush1.bf16.msra.mxu0 %v768
    %1045 = vmatprep.subr.bf16.mxu0 %v773
    %1046 = vmatpush1.bf16.msra.mxu0 %v772
    %1047 = vmatprep.subr.bf16.mxu0 %v777
    %1048 = vmatpush1.bf16.msra.mxu0 %v776
    %1049 = vmatprep.subr.bf16.mxu0 %v781
    %1050 = vmatpush1.bf16.msra.mxu0 %v780
    %1051 = vmatprep.subr.bf16.mxu0 %v785
    %1052 = vmatpush1.bf16.msra.mxu0 %v784
    %1053 = vmatprep.subr.bf16.mxu0 %v789
    %1054 = vmatpush1.bf16.msra.mxu0 %v788
    %1055 = vmatprep.subr.bf16.mxu0 %v793
    %1056 = vmatpush1.bf16.msra.mxu0 %v792
    %1057 = vmatprep.subr.bf16.mxu0 %v797
    %1058 = vmatpush1.bf16.msra.mxu0 %v796
    %1059 = vmatprep.subr.bf16.mxu0 %v801
    %1060 = vmatpush1.bf16.msra.mxu0 %v800
    %1061 = vmatprep.subr.bf16.mxu0 %v805
    %1062 = vmatpush1.bf16.msra.mxu0 %v804
    %1063 = vmatprep.subr.bf16.mxu0 %v809
    %1064 = vmatpush1.bf16.msra.mxu0 %v808
    %1065 = vmatprep.subr.bf16.mxu0 %v813
    %1066 = vmatpush1.bf16.msra.mxu0 %v812
    %1067 = vmatprep.subr.bf16.mxu0 %v817
    %1068 = vmatpush1.bf16.msra.mxu0 %v816
    %1069 = vmatprep.subr.bf16.mxu0 %v821
    %1070 = vmatpush1.bf16.msra.mxu0 %v820
    %1071 = vmatprep.subr.bf16.mxu0 %v825
    %1072 = vmatpush1.bf16.msra.mxu0 %v824
    %1073 = vmatprep.mubr.bf16.mxu0 %v249
    %1074 = vmatmul.mubr.bf16.gmra.mrb[0].mxu0 %v248
    %v1075 = vpop.f32.mrb[0].mxu0
    %v1076 = vadd.f32 %v1024, %v1075
    %v1077 = vpop.f32.mrb[0].mxu0
    %v1078 = vadd.f32 %v1028, %v1077
    %v1079 = vpop.f32.mrb[0].mxu0
    %v1080 = vpop.f32.mrb[0].mxu0
    %1081 = vdwg.mxu0
    %1082 = vmatprep.subr.bf16.mxu0 %v829
    %1083 = vmatpush1.bf16.msra.mxu0 %v828
    %1084 = vmatprep.subr.bf16.mxu0 %v833
    %1085 = vmatpush1.bf16.msra.mxu0 %v832
    %1086 = vmatprep.subr.bf16.mxu0 %v837
    %1087 = vmatpush1.bf16.msra.mxu0 %v836
    %1088 = vmatprep.subr.bf16.mxu0 %v841
    %1089 = vmatpush1.bf16.msra.mxu0 %v840
    %1090 = vmatprep.subr.bf16.mxu0 %v845
    %1091 = vmatpush1.bf16.msra.mxu0 %v844
    %1092 = vmatprep.subr.bf16.mxu0 %v849
    %1093 = vmatpush1.bf16.msra.mxu0 %v848
    %1094 = vmatprep.subr.bf16.mxu0 %v853
    %1095 = vmatpush1.bf16.msra.mxu0 %v852
    %1096 = vmatprep.subr.bf16.mxu0 %v857
    %1097 = vmatpush1.bf16.msra.mxu0 %v856
    %1098 = vmatprep.subr.bf16.mxu0 %v861
    %1099 = vmatpush1.bf16.msra.mxu0 %v860
    %1100 = vmatprep.subr.bf16.mxu0 %v865
    %1101 = vmatpush1.bf16.msra.mxu0 %v864
    %1102 = vmatprep.subr.bf16.mxu0 %v869
    %1103 = vmatpush1.bf16.msra.mxu0 %v868
    %1104 = vmatprep.subr.bf16.mxu0 %v873
    %1105 = vmatpush1.bf16.msra.mxu0 %v872
    %1106 = vmatprep.subr.bf16.mxu0 %v877
    %1107 = vmatpush1.bf16.msra.mxu0 %v876
    %1108 = vmatprep.subr.bf16.mxu0 %v881
    %1109 = vmatpush1.bf16.msra.mxu0 %v880
    %1110 = vmatprep.subr.bf16.mxu0 %v885
    %1111 = vmatpush1.bf16.msra.mxu0 %v884
    %1112 = vmatprep.subr.bf16.mxu0 %v889
    %1113 = vmatpush1.bf16.msra.mxu0 %v888
    %1114 = vmatprep.mubr.bf16.mxu0 %v251
    %1115 = vmatmul.mubr.bf16.gmra.mrb[0].mxu0 %v250
    %v1116 = vpop.f32.mrb[0].mxu0
    %v1117 = vadd.f32 %v1076, %v1116
    %v1118 = vpop.f32.mrb[0].mxu0
    %v1119 = vadd.f32 %v1078, %v1118
    %v1120 = vpop.f32.mrb[0].mxu0
    %v1121 = vpop.f32.mrb[0].mxu0
    %1122 = vdwg.mxu0
    %1123 = vmatprep.subr.bf16.mxu0 %v767
    %1124 = vmatpush1.bf16.msra.mxu0 %v766
    %1125 = vmatprep.subr.bf16.mxu0 %v771
    %1126 = vmatpush1.bf16.msra.mxu0 %v770
    %1127 = vmatprep.subr.bf16.mxu0 %v775
    %1128 = vmatpush1.bf16.msra.mxu0 %v774
    %1129 = vmatprep.subr.bf16.mxu0 %v779
    %1130 = vmatpush1.bf16.msra.mxu0 %v778
    %1131 = vmatprep.subr.bf16.mxu0 %v783
    %1132 = vmatpush1.bf16.msra.mxu0 %v782
    %1133 = vmatprep.subr.bf16.mxu0 %v787
    %1134 = vmatpush1.bf16.msra.mxu0 %v786
    %1135 = vmatprep.subr.bf16.mxu0 %v791
    %1136 = vmatpush1.bf16.msra.mxu0 %v790
    %1137 = vmatprep.subr.bf16.mxu0 %v795
    %1138 = vmatpush1.bf16.msra.mxu0 %v794
    %1139 = vmatprep.subr.bf16.mxu0 %v799
    %1140 = vmatpush1.bf16.msra.mxu0 %v798
    %1141 = vmatprep.subr.bf16.mxu0 %v803
    %1142 = vmatpush1.bf16.msra.mxu0 %v802
    %1143 = vmatprep.subr.bf16.mxu0 %v807
    %1144 = vmatpush1.bf16.msra.mxu0 %v806
    %1145 = vmatprep.subr.bf16.mxu0 %v811
    %1146 = vmatpush1.bf16.msra.mxu0 %v810
    %1147 = vmatprep.subr.bf16.mxu0 %v815
    %1148 = vmatpush1.bf16.msra.mxu0 %v814
    %1149 = vmatprep.subr.bf16.mxu0 %v819
    %1150 = vmatpush1.bf16.msra.mxu0 %v818
    %1151 = vmatprep.subr.bf16.mxu0 %v823
    %1152 = vmatpush1.bf16.msra.mxu0 %v822
    %1153 = vmatprep.subr.bf16.mxu0 %v827
    %1154 = vmatpush1.bf16.msra.mxu0 %v826
    %1155 = vmatprep.mubr.bf16.mxu0 %v249
    %1156 = vmatmul.mubr.bf16.gmra.mrb[0].mxu0 %v248
    %v1157 = vpop.f32.mrb[0].mxu0
    %v1158 = vadd.f32 %v1032, %v1157
    %v1159 = vpop.f32.mrb[0].mxu0
    %v1160 = vadd.f32 %v1036, %v1159
    %v1161 = vpop.f32.mrb[0].mxu0
    %v1162 = vpop.f32.mrb[0].mxu0
    %1163 = vdwg.mxu0
    %1164 = vmatprep.subr.bf16.mxu0 %v831
    %1165 = vmatpush1.bf16.msra.mxu0 %v830
    %1166 = vmatprep.subr.bf16.mxu0 %v835
    %1167 = vmatpush1.bf16.msra.mxu0 %v834
    %1168 = vmatprep.subr.bf16.mxu0 %v839
    %1169 = vmatpush1.bf16.msra.mxu0 %v838
    %1170 = vmatprep.subr.bf16.mxu0 %v843
    %1171 = vmatpush1.bf16.msra.mxu0 %v842
    %1172 = vmatprep.subr.bf16.mxu0 %v847
    %1173 = vmatpush1.bf16.msra.mxu0 %v846
    %1174 = vmatprep.subr.bf16.mxu0 %v851
    %1175 = vmatpush1.bf16.msra.mxu0 %v850
    %1176 = vmatprep.subr.bf16.mxu0 %v855
    %1177 = vmatpush1.bf16.msra.mxu0 %v854
    %1178 = vmatprep.subr.bf16.mxu0 %v859
    %1179 = vmatpush1.bf16.msra.mxu0 %v858
    %1180 = vmatprep.subr.bf16.mxu0 %v863
    %1181 = vmatpush1.bf16.msra.mxu0 %v862
    %1182 = vmatprep.subr.bf16.mxu0 %v867
    %1183 = vmatpush1.bf16.msra.mxu0 %v866
    %1184 = vmatprep.subr.bf16.mxu0 %v871
    %1185 = vmatpush1.bf16.msra.mxu0 %v870
    %1186 = vmatprep.subr.bf16.mxu0 %v875
    %1187 = vmatpush1.bf16.msra.mxu0 %v874
    %1188 = vmatprep.subr.bf16.mxu0 %v879
    %1189 = vmatpush1.bf16.msra.mxu0 %v878
    %1190 = vmatprep.subr.bf16.mxu0 %v883
    %1191 = vmatpush1.bf16.msra.mxu0 %v882
    %1192 = vmatprep.subr.bf16.mxu0 %v887
    %1193 = vmatpush1.bf16.msra.mxu0 %v886
    %1194 = vmatprep.subr.bf16.mxu0 %v891
    %1195 = vmatpush1.bf16.msra.mxu0 %v890
    %1196 = vmatprep.mubr.bf16.mxu0 %v251
    %1197 = vmatmul.mubr.bf16.gmra.mrb[0].mxu0 %v250
    %v1198 = vpop.f32.mrb[0].mxu0
    %v1199 = vadd.f32 %v1158, %v1198
    %v1200 = vpop.f32.mrb[0].mxu0
    %v1201 = vadd.f32 %v1160, %v1200
    %v1202 = vpop.f32.mrb[0].mxu0
    %v1203 = vpop.f32.mrb[0].mxu0
    %1204 = vdwg.mxu0
    %vm1205 = vcmp.ge.f32.partialorder %v1117, 0.0
    %vm1206 = vcmp.ge.f32.partialorder %v1119, 0.0
    %vm1207 = vcmp.ge.f32.partialorder %v1199, 0.0
    %vm1208 = vcmp.ge.f32.partialorder %v1201, 0.0
    %v1209 = vmul.f32 %v1117, 0.2
    %v1210 = vmul.f32 %v1119, 0.2
    %v1211 = vmul.f32 %v1199, 0.2
    %v1212 = vmul.f32 %v1201, 0.2
    %v1213 = vsel %vm1205, %v1117, %v1209
    %v1214 = vsel %vm1206, %v1119, %v1210
    %v1215 = vsel %vm1207, %v1199, %v1211
    %v1216 = vsel %vm1208, %v1201, %v1212
    %v1217 = vpack.c.bf16 %v1213, %v1213
    %v1218 = vpack.c.bf16 %v1214, %v1214
    %v1219 = vpack.c.bf16 %v1215, %v1215
    %v1220 = vpack.c.bf16 %v1216, %v1216
    %v1221 = vld [vmem:[#allocation6] sm:$0xff]
    %v1222 = vld [vmem:[#allocation6 + $0x8] sm:$0xff]
    %v1223 = vld [vmem:[#allocation6 + $0x10] sm:$0xff]
    %v1224 = vld [vmem:[#allocation6 + $0x18] sm:$0xff]
    %v1225 = vld [vmem:[#allocation6 + $0x20] sm:$0xff]
    %v1226 = vld [vmem:[#allocation6 + $0x28] sm:$0xff]
    %v1227 = vld [vmem:[#allocation6 + $0x30] sm:$0xff]
    %v1228 = vld [vmem:[#allocation6 + $0x38] sm:$0xff]
    %v1229 = vld [vmem:[#allocation6 + $0x40] sm:$0xff]
    %v1230 = vld [vmem:[#allocation6 + $0x48] sm:$0xff]
    %v1231 = vld [vmem:[#allocation6 + $0x50] sm:$0xff]
    %v1232 = vld [vmem:[#allocation6 + $0x58] sm:$0xff]
    %v1233 = vld [vmem:[#allocation6 + $0x60] sm:$0xff]
    %v1234 = vld [vmem:[#allocation6 + $0x68] sm:$0xff]
    %v1235 = vld [vmem:[#allocation6 + $0x70] sm:$0xff]
    %v1236 = vld [vmem:[#allocation6 + $0x78] sm:$0xff]
    %v1237 = vld [vmem:[#allocation6 + $0x80] sm:$0xff]
    %v1238 = vld [vmem:[#allocation6 + $0x88] sm:$0xff]
    %v1239 = vld [vmem:[#allocation6 + $0x90] sm:$0xff]
    %v1240 = vld [vmem:[#allocation6 + $0x98] sm:$0xff]
    %v1241 = vld [vmem:[#allocation6 + $0xa0] sm:$0xff]
    %v1242 = vld [vmem:[#allocation6 + $0xa8] sm:$0xff]
    %v1243 = vld [vmem:[#allocation6 + $0xb0] sm:$0xff]
    %v1244 = vld [vmem:[#allocation6 + $0xb8] sm:$0xff]
    %v1245 = vld [vmem:[#allocation6 + $0xc0] sm:$0xff]
    %v1246 = vld [vmem:[#allocation6 + $0xc8] sm:$0xff]
    %v1247 = vld [vmem:[#allocation6 + $0xd0] sm:$0xff]
    %v1248 = vld [vmem:[#allocation6 + $0xd8] sm:$0xff]
    %v1249 = vld [vmem:[#allocation6 + $0xe0] sm:$0xff]
    %v1250 = vld [vmem:[#allocation6 + $0xe8] sm:$0xff]
    %v1251 = vld [vmem:[#allocation6 + $0xf0] sm:$0xff]
    %v1252 = vld [vmem:[#allocation6 + $0xf8] sm:$0xff]
    %v1253 = vld [vmem:[#allocation6 + $0x100] sm:$0xff]
    %v1254 = vld [vmem:[#allocation6 + $0x108] sm:$0xff]
    %v1255 = vld [vmem:[#allocation6 + $0x110] sm:$0xff]
    %v1256 = vld [vmem:[#allocation6 + $0x118] sm:$0xff]
    %v1257 = vld [vmem:[#allocation6 + $0x120] sm:$0xff]
    %v1258 = vld [vmem:[#allocation6 + $0x128] sm:$0xff]
    %v1259 = vld [vmem:[#allocation6 + $0x130] sm:$0xff]
    %v1260 = vld [vmem:[#allocation6 + $0x138] sm:$0xff]
    %v1261 = vld [vmem:[#allocation6 + $0x140] sm:$0xff]
    %v1262 = vld [vmem:[#allocation6 + $0x148] sm:$0xff]
    %v1263 = vld [vmem:[#allocation6 + $0x150] sm:$0xff]
    %v1264 = vld [vmem:[#allocation6 + $0x158] sm:$0xff]
    %v1265 = vld [vmem:[#allocation6 + $0x160] sm:$0xff]
    %v1266 = vld [vmem:[#allocation6 + $0x168] sm:$0xff]
    %v1267 = vld [vmem:[#allocation6 + $0x170] sm:$0xff]
    %v1268 = vld [vmem:[#allocation6 + $0x178] sm:$0xff]
    %v1269 = vld [vmem:[#allocation6 + $0x180] sm:$0xff]
    %v1270 = vld [vmem:[#allocation6 + $0x188] sm:$0xff]
    %v1271 = vld [vmem:[#allocation6 + $0x190] sm:$0xff]
    %v1272 = vld [vmem:[#allocation6 + $0x198] sm:$0xff]
    %v1273 = vld [vmem:[#allocation6 + $0x1a0] sm:$0xff]
    %v1274 = vld [vmem:[#allocation6 + $0x1a8] sm:$0xff]
    %v1275 = vld [vmem:[#allocation6 + $0x1b0] sm:$0xff]
    %v1276 = vld [vmem:[#allocation6 + $0x1b8] sm:$0xff]
    %v1277 = vld [vmem:[#allocation6 + $0x1c0] sm:$0xff]
    %v1278 = vld [vmem:[#allocation6 + $0x1c8] sm:$0xff]
    %v1279 = vld [vmem:[#allocation6 + $0x1d0] sm:$0xff]
    %v1280 = vld [vmem:[#allocation6 + $0x1d8] sm:$0xff]
    %v1281 = vld [vmem:[#allocation6 + $0x1e0] sm:$0xff]
    %v1282 = vld [vmem:[#allocation6 + $0x1e8] sm:$0xff]
    %v1283 = vld [vmem:[#allocation6 + $0x1f0] sm:$0xff]
    %v1284 = vld [vmem:[#allocation6 + $0x1f8] sm:$0xff]
    %v1285 = vld [vmem:[#allocation6 + $0x200] sm:$0xff]
    %v1286 = vld [vmem:[#allocation6 + $0x208] sm:$0xff]
    %v1287 = vld [vmem:[#allocation6 + $0x210] sm:$0xff]
    %v1288 = vld [vmem:[#allocation6 + $0x218] sm:$0xff]
    %v1289 = vld [vmem:[#allocation6 + $0x220] sm:$0xff]
    %v1290 = vld [vmem:[#allocation6 + $0x228] sm:$0xff]
    %v1291 = vld [vmem:[#allocation6 + $0x230] sm:$0xff]
    %v1292 = vld [vmem:[#allocation6 + $0x238] sm:$0xff]
    %v1293 = vld [vmem:[#allocation6 + $0x240] sm:$0xff]
    %v1294 = vld [vmem:[#allocation6 + $0x248] sm:$0xff]
    %v1295 = vld [vmem:[#allocation6 + $0x250] sm:$0xff]
    %v1296 = vld [vmem:[#allocation6 + $0x258] sm:$0xff]
    %v1297 = vld [vmem:[#allocation6 + $0x260] sm:$0xff]
    %v1298 = vld [vmem:[#allocation6 + $0x268] sm:$0xff]
    %v1299 = vld [vmem:[#allocation6 + $0x270] sm:$0xff]
    %v1300 = vld [vmem:[#allocation6 + $0x278] sm:$0xff]
    %v1301 = vld [vmem:[#allocation6 + $0x280] sm:$0xff]
    %v1302 = vld [vmem:[#allocation6 + $0x288] sm:$0xff]
    %v1303 = vld [vmem:[#allocation6 + $0x290] sm:$0xff]
    %v1304 = vld [vmem:[#allocation6 + $0x298] sm:$0xff]
    %v1305 = vld [vmem:[#allocation6 + $0x2a0] sm:$0xff]
    %v1306 = vld [vmem:[#allocation6 + $0x2a8] sm:$0xff]
    %v1307 = vld [vmem:[#allocation6 + $0x2b0] sm:$0xff]
    %v1308 = vld [vmem:[#allocation6 + $0x2b8] sm:$0xff]
    %v1309 = vld [vmem:[#allocation6 + $0x2c0] sm:$0xff]
    %v1310 = vld [vmem:[#allocation6 + $0x2c8] sm:$0xff]
    %v1311 = vld [vmem:[#allocation6 + $0x2d0] sm:$0xff]
    %v1312 = vld [vmem:[#allocation6 + $0x2d8] sm:$0xff]
    %v1313 = vld [vmem:[#allocation6 + $0x2e0] sm:$0xff]
    %v1314 = vld [vmem:[#allocation6 + $0x2e8] sm:$0xff]
    %v1315 = vld [vmem:[#allocation6 + $0x2f0] sm:$0xff]
    %v1316 = vld [vmem:[#allocation6 + $0x2f8] sm:$0xff]
    %v1317 = vld [vmem:[#allocation6 + $0x300] sm:$0xff]
    %v1318 = vld [vmem:[#allocation6 + $0x308] sm:$0xff]
    %v1319 = vld [vmem:[#allocation6 + $0x310] sm:$0xff]
    %v1320 = vld [vmem:[#allocation6 + $0x318] sm:$0xff]
    %v1321 = vld [vmem:[#allocation6 + $0x320] sm:$0xff]
    %v1322 = vld [vmem:[#allocation6 + $0x328] sm:$0xff]
    %v1323 = vld [vmem:[#allocation6 + $0x330] sm:$0xff]
    %v1324 = vld [vmem:[#allocation6 + $0x338] sm:$0xff]
    %v1325 = vld [vmem:[#allocation6 + $0x340] sm:$0xff]
    %v1326 = vld [vmem:[#allocation6 + $0x348] sm:$0xff]
    %v1327 = vld [vmem:[#allocation6 + $0x350] sm:$0xff]
    %v1328 = vld [vmem:[#allocation6 + $0x358] sm:$0xff]
    %v1329 = vld [vmem:[#allocation6 + $0x360] sm:$0xff]
    %v1330 = vld [vmem:[#allocation6 + $0x368] sm:$0xff]
    %v1331 = vld [vmem:[#allocation6 + $0x370] sm:$0xff]
    %v1332 = vld [vmem:[#allocation6 + $0x378] sm:$0xff]
    %v1333 = vld [vmem:[#allocation6 + $0x380] sm:$0xff]
    %v1334 = vld [vmem:[#allocation6 + $0x388] sm:$0xff]
    %v1335 = vld [vmem:[#allocation6 + $0x390] sm:$0xff]
    %v1336 = vld [vmem:[#allocation6 + $0x398] sm:$0xff]
    %v1337 = vld [vmem:[#allocation6 + $0x3a0] sm:$0xff]
    %v1338 = vld [vmem:[#allocation6 + $0x3a8] sm:$0xff]
    %v1339 = vld [vmem:[#allocation6 + $0x3b0] sm:$0xff]
    %v1340 = vld [vmem:[#allocation6 + $0x3b8] sm:$0xff]
    %v1341 = vld [vmem:[#allocation6 + $0x3c0] sm:$0xff]
    %v1342 = vld [vmem:[#allocation6 + $0x3c8] sm:$0xff]
    %v1343 = vld [vmem:[#allocation6 + $0x3d0] sm:$0xff]
    %v1344 = vld [vmem:[#allocation6 + $0x3d8] sm:$0xff]
    %v1345 = vld [vmem:[#allocation6 + $0x3e0] sm:$0xff]
    %v1346 = vld [vmem:[#allocation6 + $0x3e8] sm:$0xff]
    %v1347 = vld [vmem:[#allocation6 + $0x3f0] sm:$0xff]
    %v1348 = vld [vmem:[#allocation6 + $0x3f8] sm:$0xff]
    %v1349 = vld [vmem:[#allocation6 + $0x400] sm:$0xff]
    %v1350 = vld [vmem:[#allocation6 + $0x408] sm:$0xff]
    %v1351 = vld [vmem:[#allocation6 + $0x410] sm:$0xff]
    %v1352 = vld [vmem:[#allocation6 + $0x418] sm:$0xff]
    %v1353 = vld [vmem:[#allocation6 + $0x420] sm:$0xff]
    %v1354 = vld [vmem:[#allocation6 + $0x428] sm:$0xff]
    %v1355 = vld [vmem:[#allocation6 + $0x430] sm:$0xff]
    %v1356 = vld [vmem:[#allocation6 + $0x438] sm:$0xff]
    %v1357 = vld [vmem:[#allocation6 + $0x440] sm:$0xff]
    %v1358 = vld [vmem:[#allocation6 + $0x448] sm:$0xff]
    %v1359 = vld [vmem:[#allocation6 + $0x450] sm:$0xff]
    %v1360 = vld [vmem:[#allocation6 + $0x458] sm:$0xff]
    %v1361 = vld [vmem:[#allocation6 + $0x460] sm:$0xff]
    %v1362 = vld [vmem:[#allocation6 + $0x468] sm:$0xff]
    %v1363 = vld [vmem:[#allocation6 + $0x470] sm:$0xff]
    %v1364 = vld [vmem:[#allocation6 + $0x478] sm:$0xff]
    %v1365 = vld [vmem:[#allocation6 + $0x480] sm:$0xff]
    %v1366 = vld [vmem:[#allocation6 + $0x488] sm:$0xff]
    %v1367 = vld [vmem:[#allocation6 + $0x490] sm:$0xff]
    %v1368 = vld [vmem:[#allocation6 + $0x498] sm:$0xff]
    %v1369 = vld [vmem:[#allocation6 + $0x4a0] sm:$0xff]
    %v1370 = vld [vmem:[#allocation6 + $0x4a8] sm:$0xff]
    %v1371 = vld [vmem:[#allocation6 + $0x4b0] sm:$0xff]
    %v1372 = vld [vmem:[#allocation6 + $0x4b8] sm:$0xff]
    %v1373 = vld [vmem:[#allocation6 + $0x4c0] sm:$0xff]
    %v1374 = vld [vmem:[#allocation6 + $0x4c8] sm:$0xff]
    %v1375 = vld [vmem:[#allocation6 + $0x4d0] sm:$0xff]
    %v1376 = vld [vmem:[#allocation6 + $0x4d8] sm:$0xff]
    %v1377 = vld [vmem:[#allocation6 + $0x4e0] sm:$0xff]
    %v1378 = vld [vmem:[#allocation6 + $0x4e8] sm:$0xff]
    %v1379 = vld [vmem:[#allocation6 + $0x4f0] sm:$0xff]
    %v1380 = vld [vmem:[#allocation6 + $0x4f8] sm:$0xff]
    %v1381 = vld [vmem:[#allocation6 + $0x500] sm:$0xff]
    %v1382 = vld [vmem:[#allocation6 + $0x508] sm:$0xff]
    %v1383 = vld [vmem:[#allocation6 + $0x510] sm:$0xff]
    %v1384 = vld [vmem:[#allocation6 + $0x518] sm:$0xff]
    %v1385 = vld [vmem:[#allocation6 + $0x520] sm:$0xff]
    %v1386 = vld [vmem:[#allocation6 + $0x528] sm:$0xff]
    %v1387 = vld [vmem:[#allocation6 + $0x530] sm:$0xff]
    %v1388 = vld [vmem:[#allocation6 + $0x538] sm:$0xff]
    %v1389 = vld [vmem:[#allocation6 + $0x540] sm:$0xff]
    %v1390 = vld [vmem:[#allocation6 + $0x548] sm:$0xff]
    %v1391 = vld [vmem:[#allocation6 + $0x550] sm:$0xff]
    %v1392 = vld [vmem:[#allocation6 + $0x558] sm:$0xff]
    %v1393 = vld [vmem:[#allocation6 + $0x560] sm:$0xff]
    %v1394 = vld [vmem:[#allocation6 + $0x568] sm:$0xff]
    %v1395 = vld [vmem:[#allocation6 + $0x570] sm:$0xff]
    %v1396 = vld [vmem:[#allocation6 + $0x578] sm:$0xff]
    %v1397 = vld [vmem:[#allocation6 + $0x580] sm:$0xff]
    %v1398 = vld [vmem:[#allocation6 + $0x588] sm:$0xff]
    %v1399 = vld [vmem:[#allocation6 + $0x590] sm:$0xff]
    %v1400 = vld [vmem:[#allocation6 + $0x598] sm:$0xff]
    %v1401 = vld [vmem:[#allocation6 + $0x5a0] sm:$0xff]
    %v1402 = vld [vmem:[#allocation6 + $0x5a8] sm:$0xff]
    %v1403 = vld [vmem:[#allocation6 + $0x5b0] sm:$0xff]
    %v1404 = vld [vmem:[#allocation6 + $0x5b8] sm:$0xff]
    %v1405 = vld [vmem:[#allocation6 + $0x5c0] sm:$0xff]
    %v1406 = vld [vmem:[#allocation6 + $0x5c8] sm:$0xff]
    %v1407 = vld [vmem:[#allocation6 + $0x5d0] sm:$0xff]
    %v1408 = vld [vmem:[#allocation6 + $0x5d8] sm:$0xff]
    %v1409 = vld [vmem:[#allocation6 + $0x5e0] sm:$0xff]
    %v1410 = vld [vmem:[#allocation6 + $0x5e8] sm:$0xff]
    %v1411 = vld [vmem:[#allocation6 + $0x5f0] sm:$0xff]
    %v1412 = vld [vmem:[#allocation6 + $0x5f8] sm:$0xff]
    %v1605 = vunpack.c.l.b16 %v1221
    %v1606 = vunpack.c.h.b16 %v1221
    %v1607 = vunpack.c.l.b16 %v1222
    %v1608 = vunpack.c.h.b16 %v1222
    %v1609 = vunpack.c.l.b16 %v1223
    %v1610 = vunpack.c.h.b16 %v1223
    %v1611 = vunpack.c.l.b16 %v1224
    %v1612 = vunpack.c.h.b16 %v1224
    %v1613 = vunpack.c.l.b16 %v1225
    %v1614 = vunpack.c.h.b16 %v1225
    %v1615 = vunpack.c.l.b16 %v1226
    %v1616 = vunpack.c.h.b16 %v1226
    %v1617 = vunpack.c.l.b16 %v1227
    %v1618 = vunpack.c.h.b16 %v1227
    %v1619 = vunpack.c.l.b16 %v1228
    %v1620 = vunpack.c.h.b16 %v1228
    %v1621 = vunpack.c.l.b16 %v1229
    %v1622 = vunpack.c.h.b16 %v1229
    %v1623 = vunpack.c.l.b16 %v1230
    %v1624 = vunpack.c.h.b16 %v1230
    %v1625 = vunpack.c.l.b16 %v1231
    %v1626 = vunpack.c.h.b16 %v1231
    %v1627 = vunpack.c.l.b16 %v1232
    %v1628 = vunpack.c.h.b16 %v1232
    %v1629 = vunpack.c.l.b16 %v1233
    %v1630 = vunpack.c.h.b16 %v1233
    %v1631 = vunpack.c.l.b16 %v1234
    %v1632 = vunpack.c.h.b16 %v1234
    %v1633 = vunpack.c.l.b16 %v1235
    %v1634 = vunpack.c.h.b16 %v1235
    %v1635 = vunpack.c.l.b16 %v1236
    %v1636 = vunpack.c.h.b16 %v1236
    %v1637 = vunpack.c.l.b16 %v1237
    %v1638 = vunpack.c.h.b16 %v1237
    %v1639 = vunpack.c.l.b16 %v1238
    %v1640 = vunpack.c.h.b16 %v1238
    %v1641 = vunpack.c.l.b16 %v1239
    %v1642 = vunpack.c.h.b16 %v1239
    %v1643 = vunpack.c.l.b16 %v1240
    %v1644 = vunpack.c.h.b16 %v1240
    %v1645 = vunpack.c.l.b16 %v1241
    %v1646 = vunpack.c.h.b16 %v1241
    %v1647 = vunpack.c.l.b16 %v1242
    %v1648 = vunpack.c.h.b16 %v1242
    %v1649 = vunpack.c.l.b16 %v1243
    %v1650 = vunpack.c.h.b16 %v1243
    %v1651 = vunpack.c.l.b16 %v1244
    %v1652 = vunpack.c.h.b16 %v1244
    %v1653 = vunpack.c.l.b16 %v1245
    %v1654 = vunpack.c.h.b16 %v1245
    %v1655 = vunpack.c.l.b16 %v1246
    %v1656 = vunpack.c.h.b16 %v1246
    %v1657 = vunpack.c.l.b16 %v1247
    %v1658 = vunpack.c.h.b16 %v1247
    %v1659 = vunpack.c.l.b16 %v1248
    %v1660 = vunpack.c.h.b16 %v1248
    %v1661 = vunpack.c.l.b16 %v1249
    %v1662 = vunpack.c.h.b16 %v1249
    %v1663 = vunpack.c.l.b16 %v1250
    %v1664 = vunpack.c.h.b16 %v1250
    %v1665 = vunpack.c.l.b16 %v1251
    %v1666 = vunpack.c.h.b16 %v1251
    %v1667 = vunpack.c.l.b16 %v1252
    %v1668 = vunpack.c.h.b16 %v1252
    %v1669 = vunpack.c.l.b16 %v1253
    %v1670 = vunpack.c.h.b16 %v1253
    %v1671 = vunpack.c.l.b16 %v1254
    %v1672 = vunpack.c.h.b16 %v1254
    %v1673 = vunpack.c.l.b16 %v1255
    %v1674 = vunpack.c.h.b16 %v1255
    %v1675 = vunpack.c.l.b16 %v1256
    %v1676 = vunpack.c.h.b16 %v1256
    %v1677 = vunpack.c.l.b16 %v1257
    %v1678 = vunpack.c.h.b16 %v1257
    %v1679 = vunpack.c.l.b16 %v1258
    %v1680 = vunpack.c.h.b16 %v1258
    %v1681 = vunpack.c.l.b16 %v1259
    %v1682 = vunpack.c.h.b16 %v1259
    %v1683 = vunpack.c.l.b16 %v1260
    %v1684 = vunpack.c.h.b16 %v1260
    %v1685 = vunpack.c.l.b16 %v1261
    %v1686 = vunpack.c.h.b16 %v1261
    %v1687 = vunpack.c.l.b16 %v1262
    %v1688 = vunpack.c.h.b16 %v1262
    %v1689 = vunpack.c.l.b16 %v1263
    %v1690 = vunpack.c.h.b16 %v1263
    %v1691 = vunpack.c.l.b16 %v1264
    %v1692 = vunpack.c.h.b16 %v1264
    %v1693 = vunpack.c.l.b16 %v1265
    %v1694 = vunpack.c.h.b16 %v1265
    %v1695 = vunpack.c.l.b16 %v1266
    %v1696 = vunpack.c.h.b16 %v1266
    %v1697 = vunpack.c.l.b16 %v1267
    %v1698 = vunpack.c.h.b16 %v1267
    %v1699 = vunpack.c.l.b16 %v1268
    %v1700 = vunpack.c.h.b16 %v1268
    %v1701 = vunpack.c.l.b16 %v1269
    %v1702 = vunpack.c.h.b16 %v1269
    %v1703 = vunpack.c.l.b16 %v1270
    %v1704 = vunpack.c.h.b16 %v1270
    %v1705 = vunpack.c.l.b16 %v1271
    %v1706 = vunpack.c.h.b16 %v1271
    %v1707 = vunpack.c.l.b16 %v1272
    %v1708 = vunpack.c.h.b16 %v1272
    %v1709 = vunpack.c.l.b16 %v1273
    %v1710 = vunpack.c.h.b16 %v1273
    %v1711 = vunpack.c.l.b16 %v1274
    %v1712 = vunpack.c.h.b16 %v1274
    %v1713 = vunpack.c.l.b16 %v1275
    %v1714 = vunpack.c.h.b16 %v1275
    %v1715 = vunpack.c.l.b16 %v1276
    %v1716 = vunpack.c.h.b16 %v1276
    %v1717 = vunpack.c.l.b16 %v1277
    %v1718 = vunpack.c.h.b16 %v1277
    %v1719 = vunpack.c.l.b16 %v1278
    %v1720 = vunpack.c.h.b16 %v1278
    %v1721 = vunpack.c.l.b16 %v1279
    %v1722 = vunpack.c.h.b16 %v1279
    %v1723 = vunpack.c.l.b16 %v1280
    %v1724 = vunpack.c.h.b16 %v1280
    %v1725 = vunpack.c.l.b16 %v1281
    %v1726 = vunpack.c.h.b16 %v1281
    %v1727 = vunpack.c.l.b16 %v1282
    %v1728 = vunpack.c.h.b16 %v1282
    %v1729 = vunpack.c.l.b16 %v1283
    %v1730 = vunpack.c.h.b16 %v1283
    %v1731 = vunpack.c.l.b16 %v1284
    %v1732 = vunpack.c.h.b16 %v1284
    %v1733 = vunpack.c.l.b16 %v1285
    %v1734 = vunpack.c.h.b16 %v1285
    %v1735 = vunpack.c.l.b16 %v1286
    %v1736 = vunpack.c.h.b16 %v1286
    %v1737 = vunpack.c.l.b16 %v1287
    %v1738 = vunpack.c.h.b16 %v1287
    %v1739 = vunpack.c.l.b16 %v1288
    %v1740 = vunpack.c.h.b16 %v1288
    %v1741 = vunpack.c.l.b16 %v1289
    %v1742 = vunpack.c.h.b16 %v1289
    %v1743 = vunpack.c.l.b16 %v1290
    %v1744 = vunpack.c.h.b16 %v1290
    %v1745 = vunpack.c.l.b16 %v1291
    %v1746 = vunpack.c.h.b16 %v1291
    %v1747 = vunpack.c.l.b16 %v1292
    %v1748 = vunpack.c.h.b16 %v1292
    %v1749 = vunpack.c.l.b16 %v1293
    %v1750 = vunpack.c.h.b16 %v1293
    %v1751 = vunpack.c.l.b16 %v1294
    %v1752 = vunpack.c.h.b16 %v1294
    %v1753 = vunpack.c.l.b16 %v1295
    %v1754 = vunpack.c.h.b16 %v1295
    %v1755 = vunpack.c.l.b16 %v1296
    %v1756 = vunpack.c.h.b16 %v1296
    %v1757 = vunpack.c.l.b16 %v1297
    %v1758 = vunpack.c.h.b16 %v1297
    %v1759 = vunpack.c.l.b16 %v1298
    %v1760 = vunpack.c.h.b16 %v1298
    %v1761 = vunpack.c.l.b16 %v1299
    %v1762 = vunpack.c.h.b16 %v1299
    %v1763 = vunpack.c.l.b16 %v1300
    %v1764 = vunpack.c.h.b16 %v1300
    %v1765 = vunpack.c.l.b16 %v1301
    %v1766 = vunpack.c.h.b16 %v1301
    %v1767 = vunpack.c.l.b16 %v1302
    %v1768 = vunpack.c.h.b16 %v1302
    %v1769 = vunpack.c.l.b16 %v1303
    %v1770 = vunpack.c.h.b16 %v1303
    %v1771 = vunpack.c.l.b16 %v1304
    %v1772 = vunpack.c.h.b16 %v1304
    %v1773 = vunpack.c.l.b16 %v1305
    %v1774 = vunpack.c.h.b16 %v1305
    %v1775 = vunpack.c.l.b16 %v1306
    %v1776 = vunpack.c.h.b16 %v1306
    %v1777 = vunpack.c.l.b16 %v1307
    %v1778 = vunpack.c.h.b16 %v1307
    %v1779 = vunpack.c.l.b16 %v1308
    %v1780 = vunpack.c.h.b16 %v1308
    %v1781 = vunpack.c.l.b16 %v1309
    %v1782 = vunpack.c.h.b16 %v1309
    %v1783 = vunpack.c.l.b16 %v1310
    %v1784 = vunpack.c.h.b16 %v1310
    %v1785 = vunpack.c.l.b16 %v1311
    %v1786 = vunpack.c.h.b16 %v1311
    %v1787 = vunpack.c.l.b16 %v1312
    %v1788 = vunpack.c.h.b16 %v1312
    %v1789 = vunpack.c.l.b16 %v1313
    %v1790 = vunpack.c.h.b16 %v1313
    %v1791 = vunpack.c.l.b16 %v1314
    %v1792 = vunpack.c.h.b16 %v1314
    %v1793 = vunpack.c.l.b16 %v1315
    %v1794 = vunpack.c.h.b16 %v1315
    %v1795 = vunpack.c.l.b16 %v1316
    %v1796 = vunpack.c.h.b16 %v1316
    %v1797 = vunpack.c.l.b16 %v1317
    %v1798 = vunpack.c.h.b16 %v1317
    %v1799 = vunpack.c.l.b16 %v1318
    %v1800 = vunpack.c.h.b16 %v1318
    %v1801 = vunpack.c.l.b16 %v1319
    %v1802 = vunpack.c.h.b16 %v1319
    %v1803 = vunpack.c.l.b16 %v1320
    %v1804 = vunpack.c.h.b16 %v1320
    %v1805 = vunpack.c.l.b16 %v1321
    %v1806 = vunpack.c.h.b16 %v1321
    %v1807 = vunpack.c.l.b16 %v1322
    %v1808 = vunpack.c.h.b16 %v1322
    %v1809 = vunpack.c.l.b16 %v1323
    %v1810 = vunpack.c.h.b16 %v1323
    %v1811 = vunpack.c.l.b16 %v1324
    %v1812 = vunpack.c.h.b16 %v1324
    %v1813 = vunpack.c.l.b16 %v1325
    %v1814 = vunpack.c.h.b16 %v1325
    %v1815 = vunpack.c.l.b16 %v1326
    %v1816 = vunpack.c.h.b16 %v1326
    %v1817 = vunpack.c.l.b16 %v1327
    %v1818 = vunpack.c.h.b16 %v1327
    %v1819 = vunpack.c.l.b16 %v1328
    %v1820 = vunpack.c.h.b16 %v1328
    %v1821 = vunpack.c.l.b16 %v1329
    %v1822 = vunpack.c.h.b16 %v1329
    %v1823 = vunpack.c.l.b16 %v1330
    %v1824 = vunpack.c.h.b16 %v1330
    %v1825 = vunpack.c.l.b16 %v1331
    %v1826 = vunpack.c.h.b16 %v1331
    %v1827 = vunpack.c.l.b16 %v1332
    %v1828 = vunpack.c.h.b16 %v1332
    %v1829 = vunpack.c.l.b16 %v1333
    %v1830 = vunpack.c.h.b16 %v1333
    %v1831 = vunpack.c.l.b16 %v1334
    %v1832 = vunpack.c.h.b16 %v1334
    %v1833 = vunpack.c.l.b16 %v1335
    %v1834 = vunpack.c.h.b16 %v1335
    %v1835 = vunpack.c.l.b16 %v1336
    %v1836 = vunpack.c.h.b16 %v1336
    %v1837 = vunpack.c.l.b16 %v1337
    %v1838 = vunpack.c.h.b16 %v1337
    %v1839 = vunpack.c.l.b16 %v1338
    %v1840 = vunpack.c.h.b16 %v1338
    %v1841 = vunpack.c.l.b16 %v1339
    %v1842 = vunpack.c.h.b16 %v1339
    %v1843 = vunpack.c.l.b16 %v1340
    %v1844 = vunpack.c.h.b16 %v1340
    %v1845 = vunpack.c.l.b16 %v1341
    %v1846 = vunpack.c.h.b16 %v1341
    %v1847 = vunpack.c.l.b16 %v1342
    %v1848 = vunpack.c.h.b16 %v1342
    %v1849 = vunpack.c.l.b16 %v1343
    %v1850 = vunpack.c.h.b16 %v1343
    %v1851 = vunpack.c.l.b16 %v1344
    %v1852 = vunpack.c.h.b16 %v1344
    %v1853 = vunpack.c.l.b16 %v1345
    %v1854 = vunpack.c.h.b16 %v1345
    %v1855 = vunpack.c.l.b16 %v1346
    %v1856 = vunpack.c.h.b16 %v1346
    %v1857 = vunpack.c.l.b16 %v1347
    %v1858 = vunpack.c.h.b16 %v1347
    %v1859 = vunpack.c.l.b16 %v1348
    %v1860 = vunpack.c.h.b16 %v1348
    %v1861 = vunpack.c.l.b16 %v1349
    %v1862 = vunpack.c.h.b16 %v1349
    %v1863 = vunpack.c.l.b16 %v1350
    %v1864 = vunpack.c.h.b16 %v1350
    %v1865 = vunpack.c.l.b16 %v1351
    %v1866 = vunpack.c.h.b16 %v1351
    %v1867 = vunpack.c.l.b16 %v1352
    %v1868 = vunpack.c.h.b16 %v1352
    %v1869 = vunpack.c.l.b16 %v1353
    %v1870 = vunpack.c.h.b16 %v1353
    %v1871 = vunpack.c.l.b16 %v1354
    %v1872 = vunpack.c.h.b16 %v1354
    %v1873 = vunpack.c.l.b16 %v1355
    %v1874 = vunpack.c.h.b16 %v1355
    %v1875 = vunpack.c.l.b16 %v1356
    %v1876 = vunpack.c.h.b16 %v1356
    %v1877 = vunpack.c.l.b16 %v1357
    %v1878 = vunpack.c.h.b16 %v1357
    %v1879 = vunpack.c.l.b16 %v1358
    %v1880 = vunpack.c.h.b16 %v1358
    %v1881 = vunpack.c.l.b16 %v1359
    %v1882 = vunpack.c.h.b16 %v1359
    %v1883 = vunpack.c.l.b16 %v1360
    %v1884 = vunpack.c.h.b16 %v1360
    %v1885 = vunpack.c.l.b16 %v1361
    %v1886 = vunpack.c.h.b16 %v1361
    %v1887 = vunpack.c.l.b16 %v1362
    %v1888 = vunpack.c.h.b16 %v1362
    %v1889 = vunpack.c.l.b16 %v1363
    %v1890 = vunpack.c.h.b16 %v1363
    %v1891 = vunpack.c.l.b16 %v1364
    %v1892 = vunpack.c.h.b16 %v1364
    %v1893 = vunpack.c.l.b16 %v1365
    %v1894 = vunpack.c.h.b16 %v1365
    %v1895 = vunpack.c.l.b16 %v1366
    %v1896 = vunpack.c.h.b16 %v1366
    %v1897 = vunpack.c.l.b16 %v1367
    %v1898 = vunpack.c.h.b16 %v1367
    %v1899 = vunpack.c.l.b16 %v1368
    %v1900 = vunpack.c.h.b16 %v1368
    %v1901 = vunpack.c.l.b16 %v1369
    %v1902 = vunpack.c.h.b16 %v1369
    %v1903 = vunpack.c.l.b16 %v1370
    %v1904 = vunpack.c.h.b16 %v1370
    %v1905 = vunpack.c.l.b16 %v1371
    %v1906 = vunpack.c.h.b16 %v1371
    %v1907 = vunpack.c.l.b16 %v1372
    %v1908 = vunpack.c.h.b16 %v1372
    %v1909 = vunpack.c.l.b16 %v1373
    %v1910 = vunpack.c.h.b16 %v1373
    %v1911 = vunpack.c.l.b16 %v1374
    %v1912 = vunpack.c.h.b16 %v1374
    %v1913 = vunpack.c.l.b16 %v1375
    %v1914 = vunpack.c.h.b16 %v1375
    %v1915 = vunpack.c.l.b16 %v1376
    %v1916 = vunpack.c.h.b16 %v1376
    %v1917 = vunpack.c.l.b16 %v1377
    %v1918 = vunpack.c.h.b16 %v1377
    %v1919 = vunpack.c.l.b16 %v1378
    %v1920 = vunpack.c.h.b16 %v1378
    %v1921 = vunpack.c.l.b16 %v1379
    %v1922 = vunpack.c.h.b16 %v1379
    %v1923 = vunpack.c.l.b16 %v1380
    %v1924 = vunpack.c.h.b16 %v1380
    %v1925 = vunpack.c.l.b16 %v1381
    %v1926 = vunpack.c.h.b16 %v1381
    %v1927 = vunpack.c.l.b16 %v1382
    %v1928 = vunpack.c.h.b16 %v1382
    %v1929 = vunpack.c.l.b16 %v1383
    %v1930 = vunpack.c.h.b16 %v1383
    %v1931 = vunpack.c.l.b16 %v1384
    %v1932 = vunpack.c.h.b16 %v1384
    %v1933 = vunpack.c.l.b16 %v1385
    %v1934 = vunpack.c.h.b16 %v1385
    %v1935 = vunpack.c.l.b16 %v1386
    %v1936 = vunpack.c.h.b16 %v1386
    %v1937 = vunpack.c.l.b16 %v1387
    %v1938 = vunpack.c.h.b16 %v1387
    %v1939 = vunpack.c.l.b16 %v1388
    %v1940 = vunpack.c.h.b16 %v1388
    %v1941 = vunpack.c.l.b16 %v1389
    %v1942 = vunpack.c.h.b16 %v1389
    %v1943 = vunpack.c.l.b16 %v1390
    %v1944 = vunpack.c.h.b16 %v1390
    %v1945 = vunpack.c.l.b16 %v1391
    %v1946 = vunpack.c.h.b16 %v1391
    %v1947 = vunpack.c.l.b16 %v1392
    %v1948 = vunpack.c.h.b16 %v1392
    %v1949 = vunpack.c.l.b16 %v1393
    %v1950 = vunpack.c.h.b16 %v1393
    %v1951 = vunpack.c.l.b16 %v1394
    %v1952 = vunpack.c.h.b16 %v1394
    %v1953 = vunpack.c.l.b16 %v1395
    %v1954 = vunpack.c.h.b16 %v1395
    %v1955 = vunpack.c.l.b16 %v1396
    %v1956 = vunpack.c.h.b16 %v1396
    %v1957 = vunpack.c.l.b16 %v1397
    %v1958 = vunpack.c.h.b16 %v1397
    %v1959 = vunpack.c.l.b16 %v1398
    %v1960 = vunpack.c.h.b16 %v1398
    %v1961 = vunpack.c.l.b16 %v1399
    %v1962 = vunpack.c.h.b16 %v1399
    %v1963 = vunpack.c.l.b16 %v1400
    %v1964 = vunpack.c.h.b16 %v1400
    %v1965 = vunpack.c.l.b16 %v1401
    %v1966 = vunpack.c.h.b16 %v1401
    %v1967 = vunpack.c.l.b16 %v1402
    %v1968 = vunpack.c.h.b16 %v1402
    %v1969 = vunpack.c.l.b16 %v1403
    %v1970 = vunpack.c.h.b16 %v1403
    %v1971 = vunpack.c.l.b16 %v1404
    %v1972 = vunpack.c.h.b16 %v1404
    %v1973 = vunpack.c.l.b16 %v1405
    %v1974 = vunpack.c.h.b16 %v1405
    %v1975 = vunpack.c.l.b16 %v1406
    %v1976 = vunpack.c.h.b16 %v1406
    %v1977 = vunpack.c.l.b16 %v1407
    %v1978 = vunpack.c.h.b16 %v1407
    %v1979 = vunpack.c.l.b16 %v1408
    %v1980 = vunpack.c.h.b16 %v1408
    %v1981 = vunpack.c.l.b16 %v1409
    %v1982 = vunpack.c.h.b16 %v1409
    %v1983 = vunpack.c.l.b16 %v1410
    %v1984 = vunpack.c.h.b16 %v1410
    %v1985 = vunpack.c.l.b16 %v1411
    %v1986 = vunpack.c.h.b16 %v1411
    %v1987 = vunpack.c.l.b16 %v1412
    %v1988 = vunpack.c.h.b16 %v1412
    %v1989 = vpack.c.b16 %v1611, %v1605
    %v1990 = vpack.c.b16 %v1612, %v1606
    %v1991 = vpack.c.b16 %v1613, %v1607
    %v1992 = vpack.c.b16 %v1614, %v1608
    %v1993 = vpack.c.b16 %v1615, %v1609
    %v1994 = vpack.c.b16 %v1616, %v1610
    %v1995 = vpack.c.b16 %v1623, %v1617
    %v1996 = vpack.c.b16 %v1624, %v1618
    %v1997 = vpack.c.b16 %v1625, %v1619
    %v1998 = vpack.c.b16 %v1626, %v1620
    %v1999 = vpack.c.b16 %v1627, %v1621
    %v2000 = vpack.c.b16 %v1628, %v1622
    %v2001 = vpack.c.b16 %v1635, %v1629
    %v2002 = vpack.c.b16 %v1636, %v1630
    %v2003 = vpack.c.b16 %v1637, %v1631
    %v2004 = vpack.c.b16 %v1638, %v1632
    %v2005 = vpack.c.b16 %v1639, %v1633
    %v2006 = vpack.c.b16 %v1640, %v1634
    %v2007 = vpack.c.b16 %v1647, %v1641
    %v2008 = vpack.c.b16 %v1648, %v1642
    %v2009 = vpack.c.b16 %v1649, %v1643
    %v2010 = vpack.c.b16 %v1650, %v1644
    %v2011 = vpack.c.b16 %v1651, %v1645
    %v2012 = vpack.c.b16 %v1652, %v1646
    %v2013 = vpack.c.b16 %v1659, %v1653
    %v2014 = vpack.c.b16 %v1660, %v1654
    %v2015 = vpack.c.b16 %v1661, %v1655
    %v2016 = vpack.c.b16 %v1662, %v1656
    %v2017 = vpack.c.b16 %v1663, %v1657
    %v2018 = vpack.c.b16 %v1664, %v1658
    %v2019 = vpack.c.b16 %v1671, %v1665
    %v2020 = vpack.c.b16 %v1672, %v1666
    %v2021 = vpack.c.b16 %v1673, %v1667
    %v2022 = vpack.c.b16 %v1674, %v1668
    %v2023 = vpack.c.b16 %v1675, %v1669
    %v2024 = vpack.c.b16 %v1676, %v1670
    %v2025 = vpack.c.b16 %v1683, %v1677
    %v2026 = vpack.c.b16 %v1684, %v1678
    %v2027 = vpack.c.b16 %v1685, %v1679
    %v2028 = vpack.c.b16 %v1686, %v1680
    %v2029 = vpack.c.b16 %v1687, %v1681
    %v2030 = vpack.c.b16 %v1688, %v1682
    %v2031 = vpack.c.b16 %v1695, %v1689
    %v2032 = vpack.c.b16 %v1696, %v1690
    %v2033 = vpack.c.b16 %v1697, %v1691
    %v2034 = vpack.c.b16 %v1698, %v1692
    %v2035 = vpack.c.b16 %v1699, %v1693
    %v2036 = vpack.c.b16 %v1700, %v1694
    %v2037 = vpack.c.b16 %v1707, %v1701
    %v2038 = vpack.c.b16 %v1708, %v1702
    %v2039 = vpack.c.b16 %v1709, %v1703
    %v2040 = vpack.c.b16 %v1710, %v1704
    %v2041 = vpack.c.b16 %v1711, %v1705
    %v2042 = vpack.c.b16 %v1712, %v1706
    %v2043 = vpack.c.b16 %v1719, %v1713
    %v2044 = vpack.c.b16 %v1720, %v1714
    %v2045 = vpack.c.b16 %v1721, %v1715
    %v2046 = vpack.c.b16 %v1722, %v1716
    %v2047 = vpack.c.b16 %v1723, %v1717
    %v2048 = vpack.c.b16 %v1724, %v1718
    %v2049 = vpack.c.b16 %v1731, %v1725
    %v2050 = vpack.c.b16 %v1732, %v1726
    %v2051 = vpack.c.b16 %v1733, %v1727
    %v2052 = vpack.c.b16 %v1734, %v1728
    %v2053 = vpack.c.b16 %v1735, %v1729
    %v2054 = vpack.c.b16 %v1736, %v1730
    %v2055 = vpack.c.b16 %v1743, %v1737
    %v2056 = vpack.c.b16 %v1744, %v1738
    %v2057 = vpack.c.b16 %v1745, %v1739
    %v2058 = vpack.c.b16 %v1746, %v1740
    %v2059 = vpack.c.b16 %v1747, %v1741
    %v2060 = vpack.c.b16 %v1748, %v1742
    %v2061 = vpack.c.b16 %v1755, %v1749
    %v2062 = vpack.c.b16 %v1756, %v1750
    %v2063 = vpack.c.b16 %v1757, %v1751
    %v2064 = vpack.c.b16 %v1758, %v1752
    %v2065 = vpack.c.b16 %v1759, %v1753
    %v2066 = vpack.c.b16 %v1760, %v1754
    %v2067 = vpack.c.b16 %v1767, %v1761
    %v2068 = vpack.c.b16 %v1768, %v1762
    %v2069 = vpack.c.b16 %v1769, %v1763
    %v2070 = vpack.c.b16 %v1770, %v1764
    %v2071 = vpack.c.b16 %v1771, %v1765
    %v2072 = vpack.c.b16 %v1772, %v1766
    %v2073 = vpack.c.b16 %v1779, %v1773
    %v2074 = vpack.c.b16 %v1780, %v1774
    %v2075 = vpack.c.b16 %v1781, %v1775
    %v2076 = vpack.c.b16 %v1782, %v1776
    %v2077 = vpack.c.b16 %v1783, %v1777
    %v2078 = vpack.c.b16 %v1784, %v1778
    %v2079 = vpack.c.b16 %v1791, %v1785
    %v2080 = vpack.c.b16 %v1792, %v1786
    %v2081 = vpack.c.b16 %v1793, %v1787
    %v2082 = vpack.c.b16 %v1794, %v1788
    %v2083 = vpack.c.b16 %v1795, %v1789
    %v2084 = vpack.c.b16 %v1796, %v1790
    %v2085 = vpack.c.b16 %v1803, %v1797
    %v2086 = vpack.c.b16 %v1804, %v1798
    %v2087 = vpack.c.b16 %v1805, %v1799
    %v2088 = vpack.c.b16 %v1806, %v1800
    %v2089 = vpack.c.b16 %v1807, %v1801
    %v2090 = vpack.c.b16 %v1808, %v1802
    %v2091 = vpack.c.b16 %v1815, %v1809
    %v2092 = vpack.c.b16 %v1816, %v1810
    %v2093 = vpack.c.b16 %v1817, %v1811
    %v2094 = vpack.c.b16 %v1818, %v1812
    %v2095 = vpack.c.b16 %v1819, %v1813
    %v2096 = vpack.c.b16 %v1820, %v1814
    %v2097 = vpack.c.b16 %v1827, %v1821
    %v2098 = vpack.c.b16 %v1828, %v1822
    %v2099 = vpack.c.b16 %v1829, %v1823
    %v2100 = vpack.c.b16 %v1830, %v1824
    %v2101 = vpack.c.b16 %v1831, %v1825
    %v2102 = vpack.c.b16 %v1832, %v1826
    %v2103 = vpack.c.b16 %v1839, %v1833
    %v2104 = vpack.c.b16 %v1840, %v1834
    %v2105 = vpack.c.b16 %v1841, %v1835
    %v2106 = vpack.c.b16 %v1842, %v1836
    %v2107 = vpack.c.b16 %v1843, %v1837
    %v2108 = vpack.c.b16 %v1844, %v1838
    %v2109 = vpack.c.b16 %v1851, %v1845
    %v2110 = vpack.c.b16 %v1852, %v1846
    %v2111 = vpack.c.b16 %v1853, %v1847
    %v2112 = vpack.c.b16 %v1854, %v1848
    %v2113 = vpack.c.b16 %v1855, %v1849
    %v2114 = vpack.c.b16 %v1856, %v1850
    %v2115 = vpack.c.b16 %v1863, %v1857
    %v2116 = vpack.c.b16 %v1864, %v1858
    %v2117 = vpack.c.b16 %v1865, %v1859
    %v2118 = vpack.c.b16 %v1866, %v1860
    %v2119 = vpack.c.b16 %v1867, %v1861
    %v2120 = vpack.c.b16 %v1868, %v1862
    %v2121 = vpack.c.b16 %v1875, %v1869
    %v2122 = vpack.c.b16 %v1876, %v1870
    %v2123 = vpack.c.b16 %v1877, %v1871
    %v2124 = vpack.c.b16 %v1878, %v1872
    %v2125 = vpack.c.b16 %v1879, %v1873
    %v2126 = vpack.c.b16 %v1880, %v1874
    %v2127 = vpack.c.b16 %v1887, %v1881
    %v2128 = vpack.c.b16 %v1888, %v1882
    %v2129 = vpack.c.b16 %v1889, %v1883
    %v2130 = vpack.c.b16 %v1890, %v1884
    %v2131 = vpack.c.b16 %v1891, %v1885
    %v2132 = vpack.c.b16 %v1892, %v1886
    %v2133 = vpack.c.b16 %v1899, %v1893
    %v2134 = vpack.c.b16 %v1900, %v1894
    %v2135 = vpack.c.b16 %v1901, %v1895
    %v2136 = vpack.c.b16 %v1902, %v1896
    %v2137 = vpack.c.b16 %v1903, %v1897
    %v2138 = vpack.c.b16 %v1904, %v1898
    %v2139 = vpack.c.b16 %v1911, %v1905
    %v2140 = vpack.c.b16 %v1912, %v1906
    %v2141 = vpack.c.b16 %v1913, %v1907
    %v2142 = vpack.c.b16 %v1914, %v1908
    %v2143 = vpack.c.b16 %v1915, %v1909
    %v2144 = vpack.c.b16 %v1916, %v1910
    %v2145 = vpack.c.b16 %v1923, %v1917
    %v2146 = vpack.c.b16 %v1924, %v1918
    %v2147 = vpack.c.b16 %v1925, %v1919
    %v2148 = vpack.c.b16 %v1926, %v1920
    %v2149 = vpack.c.b16 %v1927, %v1921
    %v2150 = vpack.c.b16 %v1928, %v1922
    %v2151 = vpack.c.b16 %v1935, %v1929
    %v2152 = vpack.c.b16 %v1936, %v1930
    %v2153 = vpack.c.b16 %v1937, %v1931
    %v2154 = vpack.c.b16 %v1938, %v1932
    %v2155 = vpack.c.b16 %v1939, %v1933
    %v2156 = vpack.c.b16 %v1940, %v1934
    %v2157 = vpack.c.b16 %v1947, %v1941
    %v2158 = vpack.c.b16 %v1948, %v1942
    %v2159 = vpack.c.b16 %v1949, %v1943
    %v2160 = vpack.c.b16 %v1950, %v1944
    %v2161 = vpack.c.b16 %v1951, %v1945
    %v2162 = vpack.c.b16 %v1952, %v1946
    %v2163 = vpack.c.b16 %v1959, %v1953
    %v2164 = vpack.c.b16 %v1960, %v1954
    %v2165 = vpack.c.b16 %v1961, %v1955
    %v2166 = vpack.c.b16 %v1962, %v1956
    %v2167 = vpack.c.b16 %v1963, %v1957
    %v2168 = vpack.c.b16 %v1964, %v1958
    %v2169 = vpack.c.b16 %v1971, %v1965
    %v2170 = vpack.c.b16 %v1972, %v1966
    %v2171 = vpack.c.b16 %v1973, %v1967
    %v2172 = vpack.c.b16 %v1974, %v1968
    %v2173 = vpack.c.b16 %v1975, %v1969
    %v2174 = vpack.c.b16 %v1976, %v1970
    %v2175 = vpack.c.b16 %v1983, %v1977
    %v2176 = vpack.c.b16 %v1984, %v1978
    %v2177 = vpack.c.b16 %v1985, %v1979
    %v2178 = vpack.c.b16 %v1986, %v1980
    %v2179 = vpack.c.b16 %v1987, %v1981
    %v2180 = vpack.c.b16 %v1988, %v1982
    %v2374 = vlaneseq
    %v2375 = vshrl.u32 %v2374, 7
    %v2376 = vsub.s32 0, %v2375
    %v2377 = vrot.slane %v78, %v2376
    %v2378 = vlaneseq
    %v2379 = vshrl.u32 %v2378, 7
    %v2380 = vsub.s32 1, %v2379
    %v2381 = vrot.slane %v78, %v2380
    %v2382 = vlaneseq
    %v2383 = vshrl.u32 %v2382, 7
    %v2384 = vsub.s32 2, %v2383
    %v2385 = vrot.slane %v78, %v2384
    %v2386 = vlaneseq
    %v2387 = vshrl.u32 %v2386, 7
    %v2388 = vsub.s32 3, %v2387
    %v2389 = vrot.slane %v78, %v2388
    %v2390 = vlaneseq
    %v2391 = vshrl.u32 %v2390, 7
    %v2392 = vsub.s32 4, %v2391
    %v2393 = vrot.slane %v78, %v2392
    %v2394 = vlaneseq
    %v2395 = vshrl.u32 %v2394, 7
    %v2396 = vsub.s32 5, %v2395
    %v2397 = vrot.slane %v78, %v2396
    %2404 = vmatprep.subr.bf16.mxu0 %v1990
    %2405 = vmatpush1.bf16.msra.mxu0 %v1989
    %2406 = vmatprep.subr.bf16.mxu0 %v1996
    %2407 = vmatpush1.bf16.msra.mxu0 %v1995
    %2408 = vmatprep.subr.bf16.mxu0 %v2002
    %2409 = vmatpush1.bf16.msra.mxu0 %v2001
    %2410 = vmatprep.subr.bf16.mxu0 %v2008
    %2411 = vmatpush1.bf16.msra.mxu0 %v2007
    %2412 = vmatprep.subr.bf16.mxu0 %v2014
    %2413 = vmatpush1.bf16.msra.mxu0 %v2013
    %2414 = vmatprep.subr.bf16.mxu0 %v2020
    %2415 = vmatpush1.bf16.msra.mxu0 %v2019
    %2416 = vmatprep.subr.bf16.mxu0 %v2026
    %2417 = vmatpush1.bf16.msra.mxu0 %v2025
    %2418 = vmatprep.subr.bf16.mxu0 %v2032
    %2419 = vmatpush1.bf16.msra.mxu0 %v2031
    %2420 = vmatprep.subr.bf16.mxu0 %v2038
    %2421 = vmatpush1.bf16.msra.mxu0 %v2037
    %2422 = vmatprep.subr.bf16.mxu0 %v2044
    %2423 = vmatpush1.bf16.msra.mxu0 %v2043
    %2424 = vmatprep.subr.bf16.mxu0 %v2050
    %2425 = vmatpush1.bf16.msra.mxu0 %v2049
    %2426 = vmatprep.subr.bf16.mxu0 %v2056
    %2427 = vmatpush1.bf16.msra.mxu0 %v2055
    %2428 = vmatprep.subr.bf16.mxu0 %v2062
    %2429 = vmatpush1.bf16.msra.mxu0 %v2061
    %2430 = vmatprep.subr.bf16.mxu0 %v2068
    %2431 = vmatpush1.bf16.msra.mxu0 %v2067
    %2432 = vmatprep.subr.bf16.mxu0 %v2074
    %2433 = vmatpush1.bf16.msra.mxu0 %v2073
    %2434 = vmatprep.subr.bf16.mxu0 %v2080
    %2435 = vmatpush1.bf16.msra.mxu0 %v2079
    %2436 = vmatprep.mubr.bf16.mxu0 %v1218
    %2437 = vmatmul.mubr.bf16.gmra.mrb[0].mxu0 %v1217
    %v2438 = vpop.f32.mrb[0].mxu0
    %v2439 = vadd.f32 %v2377, %v2438
    %v2440 = vpop.f32.mrb[0].mxu0
    %v2441 = vadd.f32 %v2381, %v2440
    %v2442 = vpop.f32.mrb[0].mxu0
    %v2443 = vpop.f32.mrb[0].mxu0
    %2444 = vdwg.mxu0
    %2445 = vmatprep.subr.bf16.mxu0 %v2086
    %2446 = vmatpush1.bf16.msra.mxu0 %v2085
    %2447 = vmatprep.subr.bf16.mxu0 %v2092
    %2448 = vmatpush1.bf16.msra.mxu0 %v2091
    %2449 = vmatprep.subr.bf16.mxu0 %v2098
    %2450 = vmatpush1.bf16.msra.mxu0 %v2097
    %2451 = vmatprep.subr.bf16.mxu0 %v2104
    %2452 = vmatpush1.bf16.msra.mxu0 %v2103
    %2453 = vmatprep.subr.bf16.mxu0 %v2110
    %2454 = vmatpush1.bf16.msra.mxu0 %v2109
    %2455 = vmatprep.subr.bf16.mxu0 %v2116
    %2456 = vmatpush1.bf16.msra.mxu0 %v2115
    %2457 = vmatprep.subr.bf16.mxu0 %v2122
    %2458 = vmatpush1.bf16.msra.mxu0 %v2121
    %2459 = vmatprep.subr.bf16.mxu0 %v2128
    %2460 = vmatpush1.bf16.msra.mxu0 %v2127
    %2461 = vmatprep.subr.bf16.mxu0 %v2134
    %2462 = vmatpush1.bf16.msra.mxu0 %v2133
    %2463 = vmatprep.subr.bf16.mxu0 %v2140
    %2464 = vmatpush1.bf16.msra.mxu0 %v2139
    %2465 = vmatprep.subr.bf16.mxu0 %v2146
    %2466 = vmatpush1.bf16.msra.mxu0 %v2145
    %2467 = vmatprep.subr.bf16.mxu0 %v2152
    %2468 = vmatpush1.bf16.msra.mxu0 %v2151
    %2469 = vmatprep.subr.bf16.mxu0 %v2158
    %2470 = vmatpush1.bf16.msra.mxu0 %v2157
    %2471 = vmatprep.subr.bf16.mxu0 %v2164
    %2472 = vmatpush1.bf16.msra.mxu0 %v2163
    %2473 = vmatprep.subr.bf16.mxu0 %v2170
    %2474 = vmatpush1.bf16.msra.mxu0 %v2169
    %2475 = vmatprep.subr.bf16.mxu0 %v2176
    %2476 = vmatpush1.bf16.msra.mxu0 %v2175
    %2477 = vmatprep.mubr.bf16.mxu0 %v1220
    %2478 = vmatmul.mubr.bf16.gmra.mrb[0].mxu0 %v1219
    %v2479 = vpop.f32.mrb[0].mxu0
    %v2480 = vadd.f32 %v2439, %v2479
    %v2481 = vpop.f32.mrb[0].mxu0
    %v2482 = vadd.f32 %v2441, %v2481
    %v2483 = vpop.f32.mrb[0].mxu0
    %v2484 = vpop.f32.mrb[0].mxu0
    %2485 = vdwg.mxu0
    %2486 = vmatprep.subr.bf16.mxu0 %v1992
    %2487 = vmatpush1.bf16.msra.mxu0 %v1991
    %2488 = vmatprep.subr.bf16.mxu0 %v1998
    %2489 = vmatpush1.bf16.msra.mxu0 %v1997
    %2490 = vmatprep.subr.bf16.mxu0 %v2004
    %2491 = vmatpush1.bf16.msra.mxu0 %v2003
    %2492 = vmatprep.subr.bf16.mxu0 %v2010
    %2493 = vmatpush1.bf16.msra.mxu0 %v2009
    %2494 = vmatprep.subr.bf16.mxu0 %v2016
    %2495 = vmatpush1.bf16.msra.mxu0 %v2015
    %2496 = vmatprep.subr.bf16.mxu0 %v2022
    %2497 = vmatpush1.bf16.msra.mxu0 %v2021
    %2498 = vmatprep.subr.bf16.mxu0 %v2028
    %2499 = vmatpush1.bf16.msra.mxu0 %v2027
    %2500 = vmatprep.subr.bf16.mxu0 %v2034
    %2501 = vmatpush1.bf16.msra.mxu0 %v2033
    %2502 = vmatprep.subr.bf16.mxu0 %v2040
    %2503 = vmatpush1.bf16.msra.mxu0 %v2039
    %2504 = vmatprep.subr.bf16.mxu0 %v2046
    %2505 = vmatpush1.bf16.msra.mxu0 %v2045
    %2506 = vmatprep.subr.bf16.mxu0 %v2052
    %2507 = vmatpush1.bf16.msra.mxu0 %v2051
    %2508 = vmatprep.subr.bf16.mxu0 %v2058
    %2509 = vmatpush1.bf16.msra.mxu0 %v2057
    %2510 = vmatprep.subr.bf16.mxu0 %v2064
    %2511 = vmatpush1.bf16.msra.mxu0 %v2063
    %2512 = vmatprep.subr.bf16.mxu0 %v2070
    %2513 = vmatpush1.bf16.msra.mxu0 %v2069
    %2514 = vmatprep.subr.bf16.mxu0 %v2076
    %2515 = vmatpush1.bf16.msra.mxu0 %v2075
    %2516 = vmatprep.subr.bf16.mxu0 %v2082
    %2517 = vmatpush1.bf16.msra.mxu0 %v2081
    %2518 = vmatprep.mubr.bf16.mxu0 %v1218
    %2519 = vmatmul.mubr.bf16.gmra.mrb[0].mxu0 %v1217
    %v2520 = vpop.f32.mrb[0].mxu0
    %v2521 = vadd.f32 %v2385, %v2520
    %v2522 = vpop.f32.mrb[0].mxu0
    %v2523 = vadd.f32 %v2389, %v2522
    %v2524 = vpop.f32.mrb[0].mxu0
    %v2525 = vpop.f32.mrb[0].mxu0
    %2526 = vdwg.mxu0
    %2527 = vmatprep.subr.bf16.mxu0 %v2088
    %2528 = vmatpush1.bf16.msra.mxu0 %v2087
    %2529 = vmatprep.subr.bf16.mxu0 %v2094
    %2530 = vmatpush1.bf16.msra.mxu0 %v2093
    %2531 = vmatprep.subr.bf16.mxu0 %v2100
    %2532 = vmatpush1.bf16.msra.mxu0 %v2099
    %2533 = vmatprep.subr.bf16.mxu0 %v2106
    %2534 = vmatpush1.bf16.msra.mxu0 %v2105
    %2535 = vmatprep.subr.bf16.mxu0 %v2112
    %2536 = vmatpush1.bf16.msra.mxu0 %v2111
    %2537 = vmatprep.subr.bf16.mxu0 %v2118
    %2538 = vmatpush1.bf16.msra.mxu0 %v2117
    %2539 = vmatprep.subr.bf16.mxu0 %v2124
    %2540 = vmatpush1.bf16.msra.mxu0 %v2123
    %2541 = vmatprep.subr.bf16.mxu0 %v2130
    %2542 = vmatpush1.bf16.msra.mxu0 %v2129
    %2543 = vmatprep.subr.bf16.mxu0 %v2136
    %2544 = vmatpush1.bf16.msra.mxu0 %v2135
    %2545 = vmatprep.subr.bf16.mxu0 %v2142
    %2546 = vmatpush1.bf16.msra.mxu0 %v2141
    %2547 = vmatprep.subr.bf16.mxu0 %v2148
    %2548 = vmatpush1.bf16.msra.mxu0 %v2147
    %2549 = vmatprep.subr.bf16.mxu0 %v2154
    %2550 = vmatpush1.bf16.msra.mxu0 %v2153
    %2551 = vmatprep.subr.bf16.mxu0 %v2160
    %2552 = vmatpush1.bf16.msra.mxu0 %v2159
    %2553 = vmatprep.subr.bf16.mxu0 %v2166
    %2554 = vmatpush1.bf16.msra.mxu0 %v2165
    %2555 = vmatprep.subr.bf16.mxu0 %v2172
    %2556 = vmatpush1.bf16.msra.mxu0 %v2171
    %2557 = vmatprep.subr.bf16.mxu0 %v2178
    %2558 = vmatpush1.bf16.msra.mxu0 %v2177
    %2559 = vmatprep.mubr.bf16.mxu0 %v1220
    %2560 = vmatmul.mubr.bf16.gmra.mrb[0].mxu0 %v1219
    %v2561 = vpop.f32.mrb[0].mxu0
    %v2562 = vadd.f32 %v2521, %v2561
    %v2563 = vpop.f32.mrb[0].mxu0
    %v2564 = vadd.f32 %v2523, %v2563
    %v2565 = vpop.f32.mrb[0].mxu0
    %v2566 = vpop.f32.mrb[0].mxu0
    %2567 = vdwg.mxu0
    %2568 = vmatprep.subr.bf16.mxu0 %v1994
    %2569 = vmatpush1.bf16.msra.mxu0 %v1993
    %2570 = vmatprep.subr.bf16.mxu0 %v2000
    %2571 = vmatpush1.bf16.msra.mxu0 %v1999
    %2572 = vmatprep.subr.bf16.mxu0 %v2006
    %2573 = vmatpush1.bf16.msra.mxu0 %v2005
    %2574 = vmatprep.subr.bf16.mxu0 %v2012
    %2575 = vmatpush1.bf16.msra.mxu0 %v2011
    %2576 = vmatprep.subr.bf16.mxu0 %v2018
    %2577 = vmatpush1.bf16.msra.mxu0 %v2017
    %2578 = vmatprep.subr.bf16.mxu0 %v2024
    %2579 = vmatpush1.bf16.msra.mxu0 %v2023
    %2580 = vmatprep.subr.bf16.mxu0 %v2030
    %2581 = vmatpush1.bf16.msra.mxu0 %v2029
    %2582 = vmatprep.subr.bf16.mxu0 %v2036
    %2583 = vmatpush1.bf16.msra.mxu0 %v2035
    %2584 = vmatprep.subr.bf16.mxu0 %v2042
    %2585 = vmatpush1.bf16.msra.mxu0 %v2041
    %2586 = vmatprep.subr.bf16.mxu0 %v2048
    %2587 = vmatpush1.bf16.msra.mxu0 %v2047
    %2588 = vmatprep.subr.bf16.mxu0 %v2054
    %2589 = vmatpush1.bf16.msra.mxu0 %v2053
    %2590 = vmatprep.subr.bf16.mxu0 %v2060
    %2591 = vmatpush1.bf16.msra.mxu0 %v2059
    %2592 = vmatprep.subr.bf16.mxu0 %v2066
    %2593 = vmatpush1.bf16.msra.mxu0 %v2065
    %2594 = vmatprep.subr.bf16.mxu0 %v2072
    %2595 = vmatpush1.bf16.msra.mxu0 %v2071
    %2596 = vmatprep.subr.bf16.mxu0 %v2078
    %2597 = vmatpush1.bf16.msra.mxu0 %v2077
    %2598 = vmatprep.subr.bf16.mxu0 %v2084
    %2599 = vmatpush1.bf16.msra.mxu0 %v2083
    %2600 = vmatprep.mubr.bf16.mxu0 %v1218
    %2601 = vmatmul.mubr.bf16.gmra.mrb[0].mxu0 %v1217
    %v2602 = vpop.f32.mrb[0].mxu0
    %v2603 = vadd.f32 %v2393, %v2602
    %v2604 = vpop.f32.mrb[0].mxu0
    %v2605 = vadd.f32 %v2397, %v2604
    %v2606 = vpop.f32.mrb[0].mxu0
    %v2607 = vpop.f32.mrb[0].mxu0
    %2608 = vdwg.mxu0
    %2609 = vmatprep.subr.bf16.mxu0 %v2090
    %2610 = vmatpush1.bf16.msra.mxu0 %v2089
    %2611 = vmatprep.subr.bf16.mxu0 %v2096
    %2612 = vmatpush1.bf16.msra.mxu0 %v2095
    %2613 = vmatprep.subr.bf16.mxu0 %v2102
    %2614 = vmatpush1.bf16.msra.mxu0 %v2101
    %2615 = vmatprep.subr.bf16.mxu0 %v2108
    %2616 = vmatpush1.bf16.msra.mxu0 %v2107
    %2617 = vmatprep.subr.bf16.mxu0 %v2114
    %2618 = vmatpush1.bf16.msra.mxu0 %v2113
    %2619 = vmatprep.subr.bf16.mxu0 %v2120
    %2620 = vmatpush1.bf16.msra.mxu0 %v2119
    %2621 = vmatprep.subr.bf16.mxu0 %v2126
    %2622 = vmatpush1.bf16.msra.mxu0 %v2125
    %2623 = vmatprep.subr.bf16.mxu0 %v2132
    %2624 = vmatpush1.bf16.msra.mxu0 %v2131
    %2625 = vmatprep.subr.bf16.mxu0 %v2138
    %2626 = vmatpush1.bf16.msra.mxu0 %v2137
    %2627 = vmatprep.subr.bf16.mxu0 %v2144
    %2628 = vmatpush1.bf16.msra.mxu0 %v2143
    %2629 = vmatprep.subr.bf16.mxu0 %v2150
    %2630 = vmatpush1.bf16.msra.mxu0 %v2149
    %2631 = vmatprep.subr.bf16.mxu0 %v2156
    %2632 = vmatpush1.bf16.msra.mxu0 %v2155
    %2633 = vmatprep.subr.bf16.mxu0 %v2162
    %2634 = vmatpush1.bf16.msra.mxu0 %v2161
    %2635 = vmatprep.subr.bf16.mxu0 %v2168
    %2636 = vmatpush1.bf16.msra.mxu0 %v2167
    %2637 = vmatprep.subr.bf16.mxu0 %v2174
    %2638 = vmatpush1.bf16.msra.mxu0 %v2173
    %2639 = vmatprep.subr.bf16.mxu0 %v2180
    %2640 = vmatpush1.bf16.msra.mxu0 %v2179
    %2641 = vmatprep.mubr.bf16.mxu0 %v1220
    %2642 = vmatmul.mubr.bf16.gmra.mrb[0].mxu0 %v1219
    %v2643 = vpop.f32.mrb[0].mxu0
    %v2644 = vadd.f32 %v2603, %v2643
    %v2645 = vpop.f32.mrb[0].mxu0
    %v2646 = vadd.f32 %v2605, %v2645
    %v2647 = vpop.f32.mrb[0].mxu0
    %v2648 = vpop.f32.mrb[0].mxu0
    %2649 = vdwg.mxu0
    %v2650 = vmul.f32 %v2480, %v2480
    %v2651 = vmul.f32 %v2562, %v2562
    %v2652 = vadd.f32 %v2650, %v2651
    %v2653 = vmul.f32 %v2644, %v2644
    %v2654 = vadd.f32 %v2652, %v2653
    %v2655 = vmax.f32 %v2654, 1e-24
    %v2656 = vrsqrt.pop %v2655
    %v2657 = vmul.f32 %v2480, %v2656
    %v2658 = vmul.f32 %v2562, %v2656
    %v2659 = vmul.f32 %v2644, %v2656
    %v2660 = vmul.f32 %v2657, %v2482
    %v2661 = vmul.f32 %v2658, %v2564
    %v2662 = vadd.f32 %v2660, %v2661
    %v2663 = vmul.f32 %v2659, %v2646
    %v2664 = vadd.f32 %v2662, %v2663
    %v2665 = vmul.f32 %v2664, %v2657
    %v2666 = vsub.f32 %v2482, %v2665
    %v2667 = vmul.f32 %v2664, %v2658
    %v2668 = vsub.f32 %v2564, %v2667
    %v2669 = vmul.f32 %v2664, %v2659
    %v2670 = vsub.f32 %v2646, %v2669
    %v2671 = vmul.f32 %v2666, %v2666
    %v2672 = vmul.f32 %v2668, %v2668
    %v2673 = vadd.f32 %v2671, %v2672
    %v2674 = vmul.f32 %v2670, %v2670
    %v2675 = vadd.f32 %v2673, %v2674
    %v2676 = vmax.f32 %v2675, 1e-24
    %v2677 = vrsqrt.pop %v2676
    %v2678 = vmul.f32 %v2666, %v2677
    %v2679 = vmul.f32 %v2668, %v2677
    %v2680 = vmul.f32 %v2670, %v2677
    %v2681 = vmul.f32 %v2658, %v2680
    %v2682 = vmul.f32 %v2659, %v2679
    %v2683 = vsub.f32 %v2681, %v2682
    %v2684 = vmul.f32 %v2659, %v2678
    %v2685 = vmul.f32 %v2657, %v2680
    %v2686 = vsub.f32 %v2684, %v2685
    %v2687 = vmul.f32 %v2657, %v2679
    %v2688 = vmul.f32 %v2658, %v2678
    %v2689 = vsub.f32 %v2687, %v2688
    %vm2690 = vcmp.lt.f32.partialorder %v2689, 1e-06
    %vm2691 = vcmp.gt.f32.partialorder %v2657, %v2679
    %v2692 = vsub.f32 0.0, %v2679
    %vm2693 = vcmp.lt.f32.partialorder %v2657, %v2692
    %v2694 = vadd.f32 %v2657, 1.0
    %v2695 = vsub.f32 %v2694, %v2679
    %v2696 = vsub.f32 %v2695, %v2689
    %v2697 = vsub.f32 1.0, %v2657
    %v2698 = vadd.f32 %v2697, %v2679
    %v2699 = vsub.f32 %v2698, %v2689
    %v2700 = vsub.f32 %v2697, %v2679
    %v2701 = vadd.f32 %v2700, %v2689
    %v2702 = vadd.f32 %v2694, %v2679
    %v2703 = vadd.f32 %v2702, %v2689
    %vm2704 = vmand %vm2690, %vm2691
    %v2705 = vsel %vm2704, 1, 0
    %v2706 = vcvt.s32.f32 %v2705
    %vm2707 = vmxor %vm2691, 1
    %vm2708 = vmand %vm2690, %vm2707
    %v2709 = vsel %vm2708, 1, 0
    %v2710 = vcvt.s32.f32 %v2709
    %vm2711 = vmxor %vm2690, 1
    %vm2712 = vmand %vm2711, %vm2693
    %v2713 = vsel %vm2712, 1, 0
    %v2714 = vcvt.s32.f32 %v2713
    %vm2715 = vmxor %vm2693, 1
    %vm2716 = vmand %vm2711, %vm2715
    %v2717 = vsel %vm2716, 1, 0
    %v2718 = vcvt.s32.f32 %v2717
    %v2719 = vsub.f32 %v2680, %v2686
    %v2720 = vadd.f32 %v2658, %v2678
    %v2721 = vadd.f32 %v2683, %v2659
    %v2722 = vsub.f32 %v2683, %v2659
    %v2723 = vadd.f32 %v2680, %v2686
    %v2724 = vsub.f32 %v2658, %v2678
    %v2725 = vmul.f32 %v2696, %v2706
    %v2726 = vmul.f32 %v2699, %v2710
    %v2727 = vadd.f32 %v2725, %v2726
    %v2728 = vmul.f32 %v2701, %v2714
    %v2729 = vadd.f32 %v2727, %v2728
    %v2730 = vmul.f32 %v2703, %v2718
    %v2731 = vadd.f32 %v2729, %v2730
    %v2732 = vrsqrt.pop %v2731
    %v2733 = vmul.f32 %v2732, 0.5
    %v2734 = vmul.f32 %v2719, %v2706
    %v2735 = vmul.f32 %v2722, %v2710
    %v2736 = vadd.f32 %v2734, %v2735
    %v2737 = vmul.f32 %v2724, %v2714
    %v2738 = vadd.f32 %v2736, %v2737
    %v2739 = vadd.f32 %v2738, %v2730
    %v2740 = vmul.f32 %v2739, %v2733
    %v2741 = vmul.f32 %v2720, %v2710
    %v2742 = vadd.f32 %v2725, %v2741
    %v2743 = vmul.f32 %v2721, %v2714
    %v2744 = vadd.f32 %v2742, %v2743
    %v2745 = vmul.f32 %v2719, %v2718
    %v2746 = vadd.f32 %v2744, %v2745
    %v2747 = vmul.f32 %v2746, %v2733
    %v2748 = vmul.f32 %v2720, %v2706
    %v2749 = vadd.f32 %v2748, %v2726
    %v2750 = vmul.f32 %v2723, %v2714
    %v2751 = vadd.f32 %v2749, %v2750
    %v2752 = vmul.f32 %v2722, %v2718
    %v2753 = vadd.f32 %v2751, %v2752
    %v2754 = vmul.f32 %v2753, %v2733
    %v2755 = vmul.f32 %v2721, %v2706
    %v2756 = vmul.f32 %v2723, %v2710
    %v2757 = vadd.f32 %v2755, %v2756
    %v2758 = vadd.f32 %v2757, %v2728
    %v2759 = vmul.f32 %v2724, %v2718
    %v2760 = vadd.f32 %v2758, %v2759
    %v2761 = vmul.f32 %v2760, %v2733
    %v2762 = vmul.f32 %v2747, %v2747
    %v2763 = vmul.f32 %v2754, %v2754
    %v2764 = vadd.f32 %v2762, %v2763
    %v2765 = vmul.f32 %v2761, %v2761
    %v2766 = vadd.f32 %v2764, %v2765
    %v2767 = vrsqrt.pop %v2766
    %v2768 = vmul.f32 %v2766, %v2767
    %vm2769 = vcmp.eq.f32.partialorder %v2766, inf
    %v2770 = vsel %vm2769, %v2766, %v2768
    %vm2771 = vcmp.eq.f32.partialorder %v2766, 0.0
    %v2772 = vand.u32 %v2766, 2147483648
    %v2773 = vsel %vm2771, %v2772, %v2770
    %vm2774 = vcmp.lt.f32.partialorder %v2740, 0.0
    %v2775 = vsub.f32 0.0, %v2773
    %v2776 = vsub.f32 0.0, %v2740
    %v2777 = vand.u32 2147483647, %v2776
    %v2778 = vand.u32 2147483647, %v2775
    %v2779 = vmin.f32 %v2777, %v2778
    %v2780 = vmax.f32 %v2777, %v2778
    %v2781 = vrcp.pop %v2780
    %v2782 = vmul.f32 %v2779, %v2781
    %v2783 = vmul.f32 %v2782, %v2782
    %v2784 = vmul.f32 0.002785687, %v2783
    %v2785 = vadd.f32 %v2784, -0.015866
    %v2786 = vmul.f32 %v2785, %v2783
    %v2787 = vadd.f32 %v2786, 0.04247222
    %v2788 = vmul.f32 %v2787, %v2783
    %v2789 = vadd.f32 %v2788, -0.074975304
    %v2790 = vmul.f32 %v2789, %v2783
    %v2791 = vadd.f32 %v2790, 0.1064488
    %v2792 = vmul.f32 %v2791, %v2783
    %v2793 = vadd.f32 %v2792, -0.14207031
    %v2794 = vmul.f32 %v2793, %v2783
    %v2795 = vadd.f32 %v2794, 0.19993454
    %v2796 = vmul.f32 %v2795, %v2783
    %v2797 = vadd.f32 %v2796, -0.33333147
    %v2798 = vmul.f32 %v2797, %v2783
    %v2799 = vmul.f32 %v2798, %v2782
    %v2800 = vadd.f32 %v2799, %v2782
    %vm2801 = vcmp.gt.f32.partialorder %v2778, %v2777
    %v2802 = vsub.f32 1.5707964, %v2800
    %v2803 = vsel %vm2801, %v2802, %v2800
    %vm2804 = vcmp.lt.f32.partialorder %v2776, 0.0
    %v2805 = vsub.f32 3.1415927, %v2803
    %v2806 = vsel %vm2804, %v2805, %v2803
    %vm2807 = vcmp.lt.s32.totalorder %v2776, 0
    %v2808 = vsel %vm2807, 3.1415927, 0.0
    %vm2809 = vcmp.eq.f32.partialorder %v2775, 0.0
    %v2810 = vsel %vm2809, %v2808, %v2806
    %vm2811 = vcmp.ne.f32.partialorder %v2776, %v2776
    %vm2812 = vcmp.ne.f32.partialorder %v2775, %v2775
    %vm2813 = vmor %vm2811, %vm2812
    %v2814 = vsel %vm2813, nan, %v2810
    %vm2815 = vcmp.lt.f32.partialorder %v2776, 0.0
    %v2816 = vsel %vm2815, 2.3561945, 0.7853982
    %vm2817 = vcmp.eq.s32.totalorder %v2777, inf
    %vm2818 = vcmp.eq.s32.totalorder %v2778, inf
    %vm2819 = vmand %vm2817, %vm2818
    %v2820 = vsel %vm2819, %v2816, %v2814
    %v2821 = vand.u32 2147483647, %v2820
    %v2822 = vand.u32 %v2775, 2147483648
    %v2823 = vor.u32 %v2821, %v2822
    %v2824 = vand.u32 2147483647, %v2740
    %v2825 = vand.u32 2147483647, %v2773
    %v2826 = vmin.f32 %v2824, %v2825
    %v2827 = vmax.f32 %v2824, %v2825
    %v2828 = vrcp.pop %v2827
    %v2829 = vmul.f32 %v2826, %v2828
    %v2830 = vmul.f32 %v2829, %v2829
    %v2831 = vmul.f32 0.002785687, %v2830
    %v2832 = vadd.f32 %v2831, -0.015866
    %v2833 = vmul.f32 %v2832, %v2830
    %v2834 = vadd.f32 %v2833, 0.04247222
    %v2835 = vmul.f32 %v2834, %v2830
    %v2836 = vadd.f32 %v2835, -0.074975304
    %v2837 = vmul.f32 %v2836, %v2830
    %v2838 = vadd.f32 %v2837, 0.1064488
    %v2839 = vmul.f32 %v2838, %v2830
    %v2840 = vadd.f32 %v2839, -0.14207031
    %v2841 = vmul.f32 %v2840, %v2830
    %v2842 = vadd.f32 %v2841, 0.19993454
    %v2843 = vmul.f32 %v2842, %v2830
    %v2844 = vadd.f32 %v2843, -0.33333147
    %v2845 = vmul.f32 %v2844, %v2830
    %v2846 = vmul.f32 %v2845, %v2829
    %v2847 = vadd.f32 %v2846, %v2829
    %vm2848 = vcmp.gt.f32.partialorder %v2825, %v2824
    %v2849 = vsub.f32 1.5707964, %v2847
    %v2850 = vsel %vm2848, %v2849, %v2847
    %vm2851 = vcmp.lt.f32.partialorder %v2740, 0.0
    %v2852 = vsub.f32 3.1415927, %v2850
    %v2853 = vsel %vm2851, %v2852, %v2850
    %vm2854 = vcmp.lt.s32.totalorder %v2740, 0
    %v2855 = vsel %vm2854, 3.1415927, 0.0
    %vm2856 = vcmp.eq.f32.partialorder %v2773, 0.0
    %v2857 = vsel %vm2856, %v2855, %v2853
    %vm2858 = vcmp.ne.f32.partialorder %v2740, %v2740
    %vm2859 = vcmp.ne.f32.partialorder %v2773, %v2773
    %vm2860 = vmor %vm2858, %vm2859
    %v2861 = vsel %vm2860, nan, %v2857
    %vm2862 = vcmp.lt.f32.partialorder %v2740, 0.0
    %v2863 = vsel %vm2862, 2.3561945, 0.7853982
    %vm2864 = vcmp.eq.s32.totalorder %v2824, inf
    %vm2865 = vcmp.eq.s32.totalorder %v2825, inf
    %vm2866 = vmand %vm2864, %vm2865
    %v2867 = vsel %vm2866, %v2863, %v2861
    %v2868 = vand.u32 2147483647, %v2867
    %v2869 = vand.u32 %v2773, 2147483648
    %v2870 = vor.u32 %v2868, %v2869
    %v2871 = vsel %vm2774, %v2823, %v2870
    %v2872 = vmul.f32 %v2871, 2.0
    %vm2873 = vcmp.gt.f32.partialorder %v2766, 0.0
    %v2874 = vmax.f32 %v2773, 1e-30
    %v2875 = vrcp.pop %v2874
    %v2876 = vmul.f32 %v2872, %v2875
    %v2877 = vsel %vm2873, %v2876, 2.0
    %v2878 = vmul.f32 %v2747, %v2877
    %2879 = vst [vmem:[%s5] sm:$0x1] %v2878
    %v2880 = vmul.f32 %v2754, %v2877
    %2881 = vst [vmem:[%s5 + $0x1] sm:$0x1] %v2880
    %v2882 = vmul.f32 %v2761, %v2877
    %2883 = vst [vmem:[%s5 + $0x2] sm:$0x1] %v2882
    // Predicated region
    $region38: #{vposer_predictor_forward.1} parent=1 // pred_check
      _
    $region39: #{vposer_predictor_forward.1} parent=1 // pred_check_branch
      %2885 = sbr.rel (0) target = $region41
    $region40: #{vposer_predictor_forward.1} parent=1 // pred_region
      _
    $region41: #{vposer_predictor_forward.1} parent=1 // pred_fallthru
      _
    // Predicated region
    $region42: #{vposer_predictor_forward.1} parent=1 // pred_check
      _
    $region43: #{vposer_predictor_forward.1} parent=1 // pred_check_branch
      %2887 = sbr.rel (0) target = $region45
    $region44: #{vposer_predictor_forward.1} parent=1 // pred_region
      _
    $region45: #{vposer_predictor_forward.1} parent=1 // pred_fallthru
      _
    %2888 = vsyncpa [#allocation3], 1
    %2889 = vsyncpa [#allocation5], 1
    %2890 = vsyncpa [#allocation8], 1

</llo_original>
